<compile_context>
chip_gen: v6e
topology: v6e:2x2x1
jax: 0.10.0
libtpu: 0.0.40
codegen_flags: <defaults>
</compile_context>

<pallas_src>
import jax
import jax.numpy as jnp
import numpy as np
from jax.experimental import pallas as pl
from jax.experimental.pallas import tpu as pltpu

# MXU operand dtype for the weight matrices.  Production setting is
# jnp.bfloat16 on v5e/v6e/v7x (halves weight DMA/VMEM bytes, runs the MXU at
# its bf16 rate) while every VPU/EUP op and all accumulations stay f32.
# Kept at f32 here so the numeric check against the pure-JAX reference stays
# tight; flip to jnp.bfloat16 for realistic shapes (loosen tolerances).
WEIGHT_DTYPE = jnp.float32

LANES = 128
SUBLANES = 8
NEG_BIG = -1e30       # vocab-pad bias; real logits never get anywhere near it


def _round_up(x, m):
    return ((x + m - 1) // m) * m


def _vocab_tiling(vocab):
    """(vocab tile width, padded vocab) — used by both packer and wrapper."""
    tile_v = LANES if vocab <= 4 * LANES else 4 * LANES     # 128 or 512 lanes
    return tile_v, _round_up(vocab, tile_v)


def _mm(a, w):
    """MXU matmul: operands in the (possibly bf16) weight dtype, f32 accum."""
    return jnp.dot(a.astype(w.dtype), w, preferred_element_type=jnp.float32)


def _pad_lanes(x, width):
    """Pad the last dim with zeros so the store is a full, unmasked vst."""
    n = x.shape[-1]
    if width == n:
        return x
    return jnp.concatenate(
        [x, jnp.zeros(x.shape[:-1] + (width - n,), x.dtype)], axis=-1)


def _decoder_kernel(ids_ref,                                   # scalar prefetch
                    emb_hbm, hid_ref, enc_ref, pk_ref, wc_ref, wih_ref, whh_ref,
                    ow_ref, ob_ref,                            # inputs
                    logp_ref, newhid_ref, attn_ref,            # outputs
                    emb_sc, h_sc, m_sc, s_sc, gather_sem):     # scratch
    Bp, T, H = enc_ref.shape
    Hp = newhid_ref.shape[1]
    Tp = attn_ref.shape[1]
    phase = pl.program_id(0)       # 0: streaming logsumexp, 1: write log-probs
    vtile = pl.program_id(1)

    # ------------------------------------------------------------ front-end
    # Runs once, at the very first grid step; h_new is carried in VMEM scratch
    # across the vocab-tiled projection passes.
    @pl.when(jnp.logical_and(phase == 0, vtile == 0))
    def _front_end():
        # -- embedding lookup: scalar-prefetched ids drive a manual row gather
        #    straight from the HBM-resident table (only Bp rows of the V*H
        #    table ever touch VMEM).
        for b in range(Bp):
            pltpu.make_async_copy(emb_hbm.at[pl.ds(ids_ref[b], 1), :],
                                  emb_sc.at[pl.ds(b, 1), :],
                                  gather_sem.at[b]).start()
        for b in range(Bp):
            pltpu.make_async_copy(emb_hbm.at[pl.ds(ids_ref[b], 1), :],
                                  emb_sc.at[pl.ds(b, 1), :],
                                  gather_sem.at[b]).wait()
        emb = emb_sc[...].astype(jnp.float32)                  # (Bp, H)
        # TODO(synk): nn.Dropout(p=0.1) on `embedded` is eval-mode identity.

        hid = hid_ref[...]                                     # (Bp, H)
        enc = enc_ref[...]                                     # (Bp, T, H)

        # -- additive attention directly in (B, T) layout.  The vat bias is
        #    dropped: softmax is shift-invariant, so it cannot change outputs.
        # TODO(synk): at H >= 128 move this lane-reduction onto the MXU
        #    (alpha.reshape(Bp*T, H) @ vat_w) to relieve the VPU/XLU slots.
        vat_w = pk_ref[0:1, :H].reshape(1, 1, H)
        alpha = jnp.tanh(enc + hid[:, None, :])                # (Bp, T, H)
        scores = jnp.sum(alpha * vat_w, axis=-1)               # (Bp, T)
        m = jnp.max(scores, axis=-1, keepdims=True)
        e = jnp.exp(scores - m)
        attn = e / jnp.sum(e, axis=-1, keepdims=True)          # exact divide
        attn_ref[...] = _pad_lanes(attn, Tp)                   # full-lane store

        # -- context vector + fused attn_combine (+ ReLU): one (Bp,2H)@(2H,H).
        applied = jnp.sum(attn[:, :, None] * enc, axis=1)      # (Bp, H)
        cat = jnp.concatenate([emb, applied], axis=-1)         # (Bp, 2H)
        x = jnp.maximum(_mm(cat, wc_ref[...]) + pk_ref[1:2, :H], 0.0)

        # -- single-step GRU as two fused (.,H)@(H,3H) matmuls; PyTorch r,z,n
        #    gate order.  At realistic H (multiple of 128) the gate slices are
        #    vreg-aligned; at H=32 they are cheap intra-vreg picks.
        gi = _mm(x, wih_ref[...]) + pk_ref[2:3, :]             # (Bp, 3H)
        gh = _mm(hid, whh_ref[...]) + pk_ref[3:4, :]           # (Bp, 3H)
        r = jax.nn.sigmoid(gi[:, :H] + gh[:, :H])
        z = jax.nn.sigmoid(gi[:, H:2 * H] + gh[:, H:2 * H])
        n = jnp.tanh(gi[:, 2 * H:] + r * gh[:, 2 * H:])
        h_new = (1.0 - z) * n + z * hid                        # (Bp, H)

        h_sc[...] = h_new
        newhid_ref[...] = _pad_lanes(h_new, Hp)                # full-lane store

        # -- init the streaming logsumexp state
        m_sc[...] = jnp.full((Bp, 1), -jnp.inf, jnp.float32)
        s_sc[...] = jnp.zeros((Bp, 1), jnp.float32)

    # ----------------------------------------------------- vocab projection
    # Logits for this vocab tile.  Padded vocab columns carry a -1e30 bias
    # (f32, added after the f32-accumulated matmul) so they vanish from the
    # logsumexp; real logits never approach -1e30.
    logits = _mm(h_sc[...], ow_ref[...]) + ob_ref[...]         # (Bp, TILE_V)

    @pl.when(phase == 0)           # pass 1: streaming max / sum-of-exp
    def _lse_update():
        m_prev = m_sc[...]
        m_new = jnp.maximum(m_prev, jnp.max(logits, axis=-1, keepdims=True))
        s_sc[...] = (s_sc[...] * jnp.exp(m_prev - m_new)
                     + jnp.sum(jnp.exp(logits - m_new), axis=-1, keepdims=True))
        m_sc[...] = m_new

    @pl.when(phase == 1)           # pass 2: exact log_softmax for this tile
    def _write_logp():
        logp_ref[...] = logits - (m_sc[...] + jnp.log(s_sc[...]))


def attention_decoder_v2(kp, input_ids, hidden, encoder_outputs):
    """Mirrors AttentiondecoderV2.forward(input, hidden, encoder_outputs)."""
    T, B, H = encoder_outputs.shape
    V = kp["emb"].shape[0]
    tile_v, Vp = _vocab_tiling(V)
    assert kp["ow"].shape[1] == Vp
    Bp = _round_up(B, SUBLANES)
    Tp = _round_up(T, LANES)
    Hp = _round_up(H, LANES)
    nv = Vp // tile_v

    # Wrapper-side layout plumbing: batch-major encoder outputs, sublane-padded
    # batch.  Padded rows are zeros (finite everywhere) and sliced off below;
    # padded token ids are 0 (their gathered rows are discarded).
    ids = jnp.pad(input_ids.astype(jnp.int32), (0, Bp - B))
    hid = jnp.pad(hidden[0], ((0, Bp - B), (0, 0)))
    enc = jnp.pad(jnp.transpose(encoder_outputs, (1, 0, 2)),
                  ((0, Bp - B), (0, 0), (0, 0)))

    grid_spec = pltpu.PrefetchScalarGridSpec(
        num_scalar_prefetch=1,                     # token ids -> SMEM
        grid=(2, nv),                              # (lse pass / write pass, vocab tile)
        in_specs=[
            pl.BlockSpec(memory_space=pl.ANY),                       # emb table stays in HBM
            pl.BlockSpec((Bp, H), lambda p, j, ids: (0, 0)),         # hidden
            pl.BlockSpec((Bp, T, H), lambda p, j, ids: (0, 0, 0)),   # encoder outputs
            pl.BlockSpec((4, 3 * H), lambda p, j, ids: (0, 0)),      # packed small params
            pl.BlockSpec((2 * H, H), lambda p, j, ids: (0, 0)),      # fused attn_combine W
            pl.BlockSpec((H, 3 * H), lambda p, j, ids: (0, 0)),      # GRU W_ih^T
            pl.BlockSpec((H, 3 * H), lambda p, j, ids: (0, 0)),      # GRU W_hh^T
            pl.BlockSpec((H, tile_v), lambda p, j, ids: (0, j)),     # out weight tile
            pl.BlockSpec((1, tile_v), lambda p, j, ids: (0, j)),     # out bias tile
        ],
        out_specs=(
            pl.BlockSpec((Bp, tile_v), lambda p, j, ids: (0, j)),    # log-probs
            pl.BlockSpec((Bp, Hp), lambda p, j, ids: (0, 0)),        # new hidden
            pl.BlockSpec((Bp, Tp), lambda p, j, ids: (0, 0)),        # attention weights
        ),
        scratch_shapes=[
            pltpu.VMEM((Bp, H), kp["emb"].dtype),   # gathered embedding rows
            pltpu.VMEM((Bp, H), jnp.float32),       # h_new, carried across vocab tiles
            pltpu.VMEM((Bp, 1), jnp.float32),       # running max
            pltpu.VMEM((Bp, 1), jnp.float32),       # running sum of exp
            pltpu.SemaphoreType.DMA((Bp,)),         # embedding-gather semaphores
        ],
    )

    logp_p, newhid_p, attn_p = pl.pallas_call(
        _decoder_kernel,
        out_shape=(
            jax.ShapeDtypeStruct((Bp, Vp), jnp.float32),   # padded log-probs
            jax.ShapeDtypeStruct((Bp, Hp), jnp.float32),   # padded new hidden
            jax.ShapeDtypeStruct((Bp, Tp), jnp.float32),   # padded attention
        ),
        grid_spec=grid_spec,
        compiler_params=pltpu.CompilerParams(
            # The vocab axis carries the streaming logsumexp scratch, so both
            # axes must stay "arbitrary".
            # TODO(synk): on v7x, split the lse into per-core partials so the
            # vocab axis can be marked "parallel" across the two TensorCores.
            dimension_semantics=("arbitrary", "arbitrary"),
            vmem_limit_bytes=32 * 1024 * 1024,
        ),
    )(ids, kp["emb"], hid, enc, kp["pk"], kp["wc"], kp["wih"], kp["whh"],
      kp["ow"], kp["ob"])

    logp = logp_p[:B, :V]
    new_hidden = newhid_p[None, :B, :H]
    attn = attn_p[:B, None, :T]                              # (B, 1, T)
    return logp, new_hidden, attn


def pack_params(p, weight_dtype=WEIGHT_DTYPE):
    """One-time repack of torch-layout params into the kernel layout."""
    V, H = p["embedding"].shape
    _, Vp = _vocab_tiling(V)
    zpad = jnp.zeros((1, 2 * H), jnp.float32)
    pk = jnp.concatenate([
        jnp.concatenate([p["vat_w"].reshape(1, H), zpad], axis=1),   # row 0: vat weight
        jnp.concatenate([p["comb_b"].reshape(1, H), zpad], axis=1),  # row 1: attn_combine bias
        p["b_ih"].reshape(1, 3 * H),                                 # row 2: GRU b_ih (r,z,n)
        p["b_hh"].reshape(1, 3 * H),                                 # row 3: GRU b_hh (r,z,n)
    ], axis=0)                                                       # (4, 3H), stays f32
    wc = p["comb_w"].T.astype(weight_dtype)                          # (2H, H) fused combine
    wih = p["w_ih"].T.astype(weight_dtype)                           # (H, 3H)
    whh = p["w_hh"].T.astype(weight_dtype)                           # (H, 3H)
    ow = jnp.zeros((H, Vp), weight_dtype).at[:, :V].set(
        p["out_w"].T.astype(weight_dtype))
    # Bias stays f32 (added after the f32-accumulated matmul); padded vocab
    # columns get -1e30 so they drop out of the logsumexp.
    ob = jnp.full((1, Vp), NEG_BIG, jnp.float32).at[0, :V].set(p["out_b"])
    return {"emb": p["embedding"].astype(weight_dtype), "pk": pk, "wc": wc,
            "wih": wih, "whh": whh, "ow": ow, "ob": ob}


def reference_forward(p, input_ids, hidden, encoder_outputs):
    """Pure-JAX mirror of the PyTorch forward (eval mode)."""
    T, B, H = encoder_outputs.shape
    embedded = p["embedding"][input_ids]                              # (B, H)
    alpha = (hidden + encoder_outputs).reshape(-1, H)                 # (T*B, H)
    aw = jnp.tanh(alpha) @ p["vat_w"].T + p["vat_b"]                  # (T*B, 1)
    aw = aw.reshape(-1, 1, B).transpose(2, 1, 0)                      # (B, 1, T)
    aw = jax.nn.softmax(aw, axis=2)
    applied = jnp.matmul(aw, jnp.transpose(encoder_outputs, (1, 0, 2)))  # (B,1,H)
    cat = jnp.concatenate([embedded, applied[:, 0, :]], axis=1)       # (B, 2H)
    x = jax.nn.relu(cat @ p["comb_w"].T + p["comb_b"])
    h = hidden[0]
    gi = x @ p["w_ih"].T + p["b_ih"]
    gh = h @ p["w_hh"].T + p["b_hh"]
    r = jax.nn.sigmoid(gi[:, :H] + gh[:, :H])
    z = jax.nn.sigmoid(gi[:, H:2 * H] + gh[:, H:2 * H])
    n = jnp.tanh(gi[:, 2 * H:] + r * gh[:, 2 * H:])
    h_new = (1.0 - z) * n + z * h
    logits = h_new @ p["out_w"].T + p["out_b"]
    return jax.nn.log_softmax(logits, axis=1), h_new[None], aw


def init_params(key, hidden_size, output_size):
    """Torch-layout parameters for AttentiondecoderV2."""
    H, V = hidden_size, output_size
    ks = jax.random.split(key, 11)
    s = 0.1
    return {
        "embedding": s * jax.random.normal(ks[0], (V, H), jnp.float32),
        "vat_w":     s * jax.random.normal(ks[1], (1, H), jnp.float32),
        "vat_b":     s * jax.random.normal(ks[2], (1,), jnp.float32),
        "comb_w":    s * jax.random.normal(ks[3], (H, 2 * H), jnp.float32),
        "comb_b":    s * jax.random.normal(ks[4], (H,), jnp.float32),
        "w_ih":      s * jax.random.normal(ks[5], (3 * H, H), jnp.float32),
        "w_hh":      s * jax.random.normal(ks[6], (3 * H, H), jnp.float32),
        "b_ih":      s * jax.random.normal(ks[7], (3 * H,), jnp.float32),
        "b_hh":      s * jax.random.normal(ks[8], (3 * H,), jnp.float32),
        "out_w":     s * jax.random.normal(ks[9], (V, H), jnp.float32),
        "out_b":     s * jax.random.normal(ks[10], (V,), jnp.float32),
    }


if __name__ == "__main__":
    H, V, T, B = 32, 64, 8, 4   # hidden_size, output_size (vocab), seq_len, batch

    key = jax.random.PRNGKey(0)
    k_in, k_hid, k_enc, k_par = jax.random.split(key, 4)
    input_ids = jax.random.randint(k_in, (B,), 0, V, dtype=jnp.int32)
    hidden = 0.1 * jax.random.normal(k_hid, (1, B, H), jnp.float32)
    encoder_outputs = 0.1 * jax.random.normal(k_enc, (T, B, H), jnp.float32)

    params = init_params(k_par, H, V)
    kparams = pack_params(params)

    fwd = jax.jit(attention_decoder_v2)
    logp, new_hidden, attn = fwd(kparams, input_ids, hidden, encoder_outputs)
    jax.block_until_ready((logp, new_hidden, attn))

    # sanity check against the pure-JAX reference (all kernel math is exact
    # f32 with WEIGHT_DTYPE=f32; loosen tolerances if weights are flipped to
    # bf16 for production shapes).
    r_logp, r_hid, r_attn = reference_forward(params, input_ids, hidden,
                                              encoder_outputs)
    assert logp.shape == (B, V)
    assert new_hidden.shape == (1, B, H)
    assert attn.shape == (B, 1, T)
    np.testing.assert_allclose(np.asarray(logp), np.asarray(r_logp),
                               atol=1e-3, rtol=1e-3)
    np.testing.assert_allclose(np.asarray(new_hidden), np.asarray(r_hid),
                               atol=1e-3, rtol=1e-3)
    np.testing.assert_allclose(np.asarray(attn), np.asarray(r_attn),
                               atol=1e-3, rtol=1e-3)

    print("KERNEL_OK")
</pallas_src>

<mosaic_0001>
module attributes {stable_mosaic.version = 11 : i64} {
  func.func @_decoder_kernel(%arg0: i32, %arg1: i32, %arg2: memref<8xi32, #tpu.memory_space<smem>>, %arg3: memref<64x32xf32, #tpu.memory_space<any>>, %arg4: memref<8x32xf32, #tpu.memory_space<vmem>>, %arg5: memref<8x8x32xf32, #tpu.memory_space<vmem>>, %arg6: memref<4x96xf32, #tpu.memory_space<vmem>>, %arg7: memref<64x32xf32, #tpu.memory_space<vmem>>, %arg8: memref<32x96xf32, #tpu.memory_space<vmem>>, %arg9: memref<32x96xf32, #tpu.memory_space<vmem>>, %arg10: memref<32x128xf32, #tpu.memory_space<vmem>>, %arg11: memref<1x128xf32, #tpu.memory_space<vmem>>, %arg12: memref<8x128xf32, #tpu.memory_space<vmem>>, %arg13: memref<8x128xf32, #tpu.memory_space<vmem>>, %arg14: memref<8x128xf32, #tpu.memory_space<vmem>>, %arg15: memref<8x32xf32, #tpu.memory_space<vmem>>, %arg16: memref<8x32xf32, #tpu.memory_space<vmem>>, %arg17: memref<8x1xf32, #tpu.memory_space<vmem>>, %arg18: memref<8x1xf32, #tpu.memory_space<vmem>>, %arg19: memref<8x!tpu.dma_semaphore, #tpu.memory_space<semaphore_mem>>) attributes {dimension_semantics = [#tpu.dimension_semantics<arbitrary>, #tpu.dimension_semantics<arbitrary>], iteration_bounds = array<i64: 2, 1>, scalar_prefetch = 1 : i64, scratch_operands = 5 : i64, tpu.core_type = #tpu.core_type<tc>, window_params = [{}, {pipeline_mode = #tpu.pipeline_mode<synchronous>, transform_indices = @transform_1, window_bounds = array<i64: 8, 32>}, {pipeline_mode = #tpu.pipeline_mode<synchronous>, transform_indices = @transform_2, window_bounds = array<i64: 8, 8, 32>}, {pipeline_mode = #tpu.pipeline_mode<synchronous>, transform_indices = @transform_3, window_bounds = array<i64: 4, 96>}, {pipeline_mode = #tpu.pipeline_mode<synchronous>, transform_indices = @transform_4, window_bounds = array<i64: 64, 32>}, {pipeline_mode = #tpu.pipeline_mode<synchronous>, transform_indices = @transform_5, window_bounds = array<i64: 32, 96>}, {pipeline_mode = #tpu.pipeline_mode<synchronous>, transform_indices = @transform_6, window_bounds = array<i64: 32, 96>}, {transform_indices = @transform_7, window_bounds = array<i64: 32, 128>}, {transform_indices = @transform_8, window_bounds = array<i64: 1, 128>}, {transform_indices = @transform_9, window_bounds = array<i64: 8, 128>}, {pipeline_mode = #tpu.pipeline_mode<synchronous>, transform_indices = @transform_10, window_bounds = array<i64: 8, 128>}, {pipeline_mode = #tpu.pipeline_mode<synchronous>, transform_indices = @transform_11, window_bounds = array<i64: 8, 128>}]} {
    %c0_i32 = arith.constant 0 : i32
    %0 = arith.cmpi eq, %arg0, %c0_i32 : i32
    %c0_i32_0 = arith.constant 0 : i32
    %1 = arith.cmpi eq, %arg1, %c0_i32_0 : i32
    %2 = arith.andi %0, %1 : i1
    %3 = arith.extui %2 : i1 to i32
    %c0_i32_1 = arith.constant 0 : i32
    %4 = arith.cmpi ne, %3, %c0_i32_1 : i32
    scf.if %4 {
      %c0_10 = arith.constant 0 : index
      %17 = memref.load %arg2[%c0_10] : memref<8xi32, #tpu.memory_space<smem>>
      %c0_i32_11 = arith.constant 0 : i32
      %c0_i32_12 = arith.constant 0 : i32
      %18 = tpu.memref_slice %arg3[%17, %c0_i32_12] : memref<64x32xf32, #tpu.memory_space<any>> -> memref<1x32xf32, #tpu.memory_space<any>>
      %c0_i32_13 = arith.constant 0 : i32
      %c0_i32_14 = arith.constant 0 : i32
      %19 = tpu.memref_slice %arg15[%c0_i32_13, %c0_i32_14] : memref<8x32xf32, #tpu.memory_space<vmem>> -> memref<1x32xf32, #tpu.memory_space<vmem>>
      %20 = tpu.memref_slice %arg19[%c0_i32_11] : memref<8x!tpu.dma_semaphore, #tpu.memory_space<semaphore_mem>> -> memref<1x!tpu.dma_semaphore, #tpu.memory_space<semaphore_mem>>
      %21 = tpu.memref_squeeze %20 : memref<1x!tpu.dma_semaphore, #tpu.memory_space<semaphore_mem>> -> memref<!tpu.dma_semaphore, #tpu.memory_space<semaphore_mem>>
      tpu.enqueue_dma source(%18 : memref<1x32xf32, #tpu.memory_space<any>>) target(%19 : memref<1x32xf32, #tpu.memory_space<vmem>>) target_semaphore(%21 : memref<!tpu.dma_semaphore, #tpu.memory_space<semaphore_mem>>)
      %c1 = arith.constant 1 : index
      %22 = memref.load %arg2[%c1] : memref<8xi32, #tpu.memory_space<smem>>
      %c1_i32_15 = arith.constant 1 : i32
      %c0_i32_16 = arith.constant 0 : i32
      %23 = tpu.memref_slice %arg3[%22, %c0_i32_16] : memref<64x32xf32, #tpu.memory_space<any>> -> memref<1x32xf32, #tpu.memory_space<any>>
      %c1_i32_17 = arith.constant 1 : i32
      %c0_i32_18 = arith.constant 0 : i32
      %24 = tpu.memref_slice %arg15[%c1_i32_17, %c0_i32_18] : memref<8x32xf32, #tpu.memory_space<vmem>> -> memref<1x32xf32, #tpu.memory_space<vmem>>
      %25 = tpu.memref_slice %arg19[%c1_i32_15] : memref<8x!tpu.dma_semaphore, #tpu.memory_space<semaphore_mem>> -> memref<1x!tpu.dma_semaphore, #tpu.memory_space<semaphore_mem>>
      %26 = tpu.memref_squeeze %25 : memref<1x!tpu.dma_semaphore, #tpu.memory_space<semaphore_mem>> -> memref<!tpu.dma_semaphore, #tpu.memory_space<semaphore_mem>>
      tpu.enqueue_dma source(%23 : memref<1x32xf32, #tpu.memory_space<any>>) target(%24 : memref<1x32xf32, #tpu.memory_space<vmem>>) target_semaphore(%26 : memref<!tpu.dma_semaphore, #tpu.memory_space<semaphore_mem>>)
      %c2 = arith.constant 2 : index
      %27 = memref.load %arg2[%c2] : memref<8xi32, #tpu.memory_space<smem>>
      %c2_i32 = arith.constant 2 : i32
      %c0_i32_19 = arith.constant 0 : i32
      %28 = tpu.memref_slice %arg3[%27, %c0_i32_19] : memref<64x32xf32, #tpu.memory_space<any>> -> memref<1x32xf32, #tpu.memory_space<any>>
      %c2_i32_20 = arith.constant 2 : i32
      %c0_i32_21 = arith.constant 0 : i32
      %29 = tpu.memref_slice %arg15[%c2_i32_20, %c0_i32_21] : memref<8x32xf32, #tpu.memory_space<vmem>> -> memref<1x32xf32, #tpu.memory_space<vmem>>
      %30 = tpu.memref_slice %arg19[%c2_i32] : memref<8x!tpu.dma_semaphore, #tpu.memory_space<semaphore_mem>> -> memref<1x!tpu.dma_semaphore, #tpu.memory_space<semaphore_mem>>
      %31 = tpu.memref_squeeze %30 : memref<1x!tpu.dma_semaphore, #tpu.memory_space<semaphore_mem>> -> memref<!tpu.dma_semaphore, #tpu.memory_space<semaphore_mem>>
      tpu.enqueue_dma source(%28 : memref<1x32xf32, #tpu.memory_space<any>>) target(%29 : memref<1x32xf32, #tpu.memory_space<vmem>>) target_semaphore(%31 : memref<!tpu.dma_semaphore, #tpu.memory_space<semaphore_mem>>)
      %c3 = arith.constant 3 : index
      %32 = memref.load %arg2[%c3] : memref<8xi32, #tpu.memory_space<smem>>
      %c3_i32 = arith.constant 3 : i32
      %c0_i32_22 = arith.constant 0 : i32
      %33 = tpu.memref_slice %arg3[%32, %c0_i32_22] : memref<64x32xf32, #tpu.memory_space<any>> -> memref<1x32xf32, #tpu.memory_space<any>>
      %c3_i32_23 = arith.constant 3 : i32
      %c0_i32_24 = arith.constant 0 : i32
      %34 = tpu.memref_slice %arg15[%c3_i32_23, %c0_i32_24] : memref<8x32xf32, #tpu.memory_space<vmem>> -> memref<1x32xf32, #tpu.memory_space<vmem>>
      %35 = tpu.memref_slice %arg19[%c3_i32] : memref<8x!tpu.dma_semaphore, #tpu.memory_space<semaphore_mem>> -> memref<1x!tpu.dma_semaphore, #tpu.memory_space<semaphore_mem>>
      %36 = tpu.memref_squeeze %35 : memref<1x!tpu.dma_semaphore, #tpu.memory_space<semaphore_mem>> -> memref<!tpu.dma_semaphore, #tpu.memory_space<semaphore_mem>>
      tpu.enqueue_dma source(%33 : memref<1x32xf32, #tpu.memory_space<any>>) target(%34 : memref<1x32xf32, #tpu.memory_space<vmem>>) target_semaphore(%36 : memref<!tpu.dma_semaphore, #tpu.memory_space<semaphore_mem>>)
      %c4 = arith.constant 4 : index
      %37 = memref.load %arg2[%c4] : memref<8xi32, #tpu.memory_space<smem>>
      %c4_i32 = arith.constant 4 : i32
      %c0_i32_25 = arith.constant 0 : i32
      %38 = tpu.memref_slice %arg3[%37, %c0_i32_25] : memref<64x32xf32, #tpu.memory_space<any>> -> memref<1x32xf32, #tpu.memory_space<any>>
      %c4_i32_26 = arith.constant 4 : i32
      %c0_i32_27 = arith.constant 0 : i32
      %39 = tpu.memref_slice %arg15[%c4_i32_26, %c0_i32_27] : memref<8x32xf32, #tpu.memory_space<vmem>> -> memref<1x32xf32, #tpu.memory_space<vmem>>
      %40 = tpu.memref_slice %arg19[%c4_i32] : memref<8x!tpu.dma_semaphore, #tpu.memory_space<semaphore_mem>> -> memref<1x!tpu.dma_semaphore, #tpu.memory_space<semaphore_mem>>
      %41 = tpu.memref_squeeze %40 : memref<1x!tpu.dma_semaphore, #tpu.memory_space<semaphore_mem>> -> memref<!tpu.dma_semaphore, #tpu.memory_space<semaphore_mem>>
      tpu.enqueue_dma source(%38 : memref<1x32xf32, #tpu.memory_space<any>>) target(%39 : memref<1x32xf32, #tpu.memory_space<vmem>>) target_semaphore(%41 : memref<!tpu.dma_semaphore, #tpu.memory_space<semaphore_mem>>)
      %c5 = arith.constant 5 : index
      %42 = memref.load %arg2[%c5] : memref<8xi32, #tpu.memory_space<smem>>
      %c5_i32 = arith.constant 5 : i32
      %c0_i32_28 = arith.constant 0 : i32
      %43 = tpu.memref_slice %arg3[%42, %c0_i32_28] : memref<64x32xf32, #tpu.memory_space<any>> -> memref<1x32xf32, #tpu.memory_space<any>>
      %c5_i32_29 = arith.constant 5 : i32
      %c0_i32_30 = arith.constant 0 : i32
      %44 = tpu.memref_slice %arg15[%c5_i32_29, %c0_i32_30] : memref<8x32xf32, #tpu.memory_space<vmem>> -> memref<1x32xf32, #tpu.memory_space<vmem>>
      %45 = tpu.memref_slice %arg19[%c5_i32] : memref<8x!tpu.dma_semaphore, #tpu.memory_space<semaphore_mem>> -> memref<1x!tpu.dma_semaphore, #tpu.memory_space<semaphore_mem>>
      %46 = tpu.memref_squeeze %45 : memref<1x!tpu.dma_semaphore, #tpu.memory_space<semaphore_mem>> -> memref<!tpu.dma_semaphore, #tpu.memory_space<semaphore_mem>>
      tpu.enqueue_dma source(%43 : memref<1x32xf32, #tpu.memory_space<any>>) target(%44 : memref<1x32xf32, #tpu.memory_space<vmem>>) target_semaphore(%46 : memref<!tpu.dma_semaphore, #tpu.memory_space<semaphore_mem>>)
      %c6 = arith.constant 6 : index
      %47 = memref.load %arg2[%c6] : memref<8xi32, #tpu.memory_space<smem>>
      %c6_i32 = arith.constant 6 : i32
      %c0_i32_31 = arith.constant 0 : i32
      %48 = tpu.memref_slice %arg3[%47, %c0_i32_31] : memref<64x32xf32, #tpu.memory_space<any>> -> memref<1x32xf32, #tpu.memory_space<any>>
      %c6_i32_32 = arith.constant 6 : i32
      %c0_i32_33 = arith.constant 0 : i32
      %49 = tpu.memref_slice %arg15[%c6_i32_32, %c0_i32_33] : memref<8x32xf32, #tpu.memory_space<vmem>> -> memref<1x32xf32, #tpu.memory_space<vmem>>
      %50 = tpu.memref_slice %arg19[%c6_i32] : memref<8x!tpu.dma_semaphore, #tpu.memory_space<semaphore_mem>> -> memref<1x!tpu.dma_semaphore, #tpu.memory_space<semaphore_mem>>
      %51 = tpu.memref_squeeze %50 : memref<1x!tpu.dma_semaphore, #tpu.memory_space<semaphore_mem>> -> memref<!tpu.dma_semaphore, #tpu.memory_space<semaphore_mem>>
      tpu.enqueue_dma source(%48 : memref<1x32xf32, #tpu.memory_space<any>>) target(%49 : memref<1x32xf32, #tpu.memory_space<vmem>>) target_semaphore(%51 : memref<!tpu.dma_semaphore, #tpu.memory_space<semaphore_mem>>)
      %c7 = arith.constant 7 : index
      %52 = memref.load %arg2[%c7] : memref<8xi32, #tpu.memory_space<smem>>
      %c7_i32 = arith.constant 7 : i32
      %c0_i32_34 = arith.constant 0 : i32
      %53 = tpu.memref_slice %arg3[%52, %c0_i32_34] : memref<64x32xf32, #tpu.memory_space<any>> -> memref<1x32xf32, #tpu.memory_space<any>>
      %c7_i32_35 = arith.constant 7 : i32
      %c0_i32_36 = arith.constant 0 : i32
      %54 = tpu.memref_slice %arg15[%c7_i32_35, %c0_i32_36] : memref<8x32xf32, #tpu.memory_space<vmem>> -> memref<1x32xf32, #tpu.memory_space<vmem>>
      %55 = tpu.memref_slice %arg19[%c7_i32] : memref<8x!tpu.dma_semaphore, #tpu.memory_space<semaphore_mem>> -> memref<1x!tpu.dma_semaphore, #tpu.memory_space<semaphore_mem>>
      %56 = tpu.memref_squeeze %55 : memref<1x!tpu.dma_semaphore, #tpu.memory_space<semaphore_mem>> -> memref<!tpu.dma_semaphore, #tpu.memory_space<semaphore_mem>>
      tpu.enqueue_dma source(%53 : memref<1x32xf32, #tpu.memory_space<any>>) target(%54 : memref<1x32xf32, #tpu.memory_space<vmem>>) target_semaphore(%56 : memref<!tpu.dma_semaphore, #tpu.memory_space<semaphore_mem>>)
      %c0_37 = arith.constant 0 : index
      %57 = memref.load %arg2[%c0_37] : memref<8xi32, #tpu.memory_space<smem>>
      %c0_i32_38 = arith.constant 0 : i32
      %c0_i32_39 = arith.constant 0 : i32
      %58 = tpu.memref_slice %arg3[%57, %c0_i32_39] : memref<64x32xf32, #tpu.memory_space<any>> -> memref<1x32xf32, #tpu.memory_space<any>>
      %c0_i32_40 = arith.constant 0 : i32
      %c0_i32_41 = arith.constant 0 : i32
      %59 = tpu.memref_slice %arg15[%c0_i32_40, %c0_i32_41] : memref<8x32xf32, #tpu.memory_space<vmem>> -> memref<1x32xf32, #tpu.memory_space<vmem>>
      %60 = tpu.memref_slice %arg19[%c0_i32_38] : memref<8x!tpu.dma_semaphore, #tpu.memory_space<semaphore_mem>> -> memref<1x!tpu.dma_semaphore, #tpu.memory_space<semaphore_mem>>
      %61 = tpu.memref_squeeze %60 : memref<1x!tpu.dma_semaphore, #tpu.memory_space<semaphore_mem>> -> memref<!tpu.dma_semaphore, #tpu.memory_space<semaphore_mem>>
      tpu.wait_dma2 semaphore(%61 : memref<!tpu.dma_semaphore, #tpu.memory_space<semaphore_mem>>) src(%58 : memref<1x32xf32, #tpu.memory_space<any>>) dst(%59 : memref<1x32xf32, #tpu.memory_space<vmem>>)
      %c1_42 = arith.constant 1 : index
      %62 = memref.load %arg2[%c1_42] : memref<8xi32, #tpu.memory_space<smem>>
      %c1_i32_43 = arith.constant 1 : i32
      %c0_i32_44 = arith.constant 0 : i32
      %63 = tpu.memref_slice %arg3[%62, %c0_i32_44] : memref<64x32xf32, #tpu.memory_space<any>> -> memref<1x32xf32, #tpu.memory_space<any>>
      %c1_i32_45 = arith.constant 1 : i32
      %c0_i32_46 = arith.constant 0 : i32
      %64 = tpu.memref_slice %arg15[%c1_i32_45, %c0_i32_46] : memref<8x32xf32, #tpu.memory_space<vmem>> -> memref<1x32xf32, #tpu.memory_space<vmem>>
      %65 = tpu.memref_slice %arg19[%c1_i32_43] : memref<8x!tpu.dma_semaphore, #tpu.memory_space<semaphore_mem>> -> memref<1x!tpu.dma_semaphore, #tpu.memory_space<semaphore_mem>>
      %66 = tpu.memref_squeeze %65 : memref<1x!tpu.dma_semaphore, #tpu.memory_space<semaphore_mem>> -> memref<!tpu.dma_semaphore, #tpu.memory_space<semaphore_mem>>
      tpu.wait_dma2 semaphore(%66 : memref<!tpu.dma_semaphore, #tpu.memory_space<semaphore_mem>>) src(%63 : memref<1x32xf32, #tpu.memory_space<any>>) dst(%64 : memref<1x32xf32, #tpu.memory_space<vmem>>)
      %c2_47 = arith.constant 2 : index
      %67 = memref.load %arg2[%c2_47] : memref<8xi32, #tpu.memory_space<smem>>
      %c2_i32_48 = arith.constant 2 : i32
      %c0_i32_49 = arith.constant 0 : i32
      %68 = tpu.memref_slice %arg3[%67, %c0_i32_49] : memref<64x32xf32, #tpu.memory_space<any>> -> memref<1x32xf32, #tpu.memory_space<any>>
      %c2_i32_50 = arith.constant 2 : i32
      %c0_i32_51 = arith.constant 0 : i32
      %69 = tpu.memref_slice %arg15[%c2_i32_50, %c0_i32_51] : memref<8x32xf32, #tpu.memory_space<vmem>> -> memref<1x32xf32, #tpu.memory_space<vmem>>
      %70 = tpu.memref_slice %arg19[%c2_i32_48] : memref<8x!tpu.dma_semaphore, #tpu.memory_space<semaphore_mem>> -> memref<1x!tpu.dma_semaphore, #tpu.memory_space<semaphore_mem>>
      %71 = tpu.memref_squeeze %70 : memref<1x!tpu.dma_semaphore, #tpu.memory_space<semaphore_mem>> -> memref<!tpu.dma_semaphore, #tpu.memory_space<semaphore_mem>>
      tpu.wait_dma2 semaphore(%71 : memref<!tpu.dma_semaphore, #tpu.memory_space<semaphore_mem>>) src(%68 : memref<1x32xf32, #tpu.memory_space<any>>) dst(%69 : memref<1x32xf32, #tpu.memory_space<vmem>>)
      %c3_52 = arith.constant 3 : index
      %72 = memref.load %arg2[%c3_52] : memref<8xi32, #tpu.memory_space<smem>>
      %c3_i32_53 = arith.constant 3 : i32
      %c0_i32_54 = arith.constant 0 : i32
      %73 = tpu.memref_slice %arg3[%72, %c0_i32_54] : memref<64x32xf32, #tpu.memory_space<any>> -> memref<1x32xf32, #tpu.memory_space<any>>
      %c3_i32_55 = arith.constant 3 : i32
      %c0_i32_56 = arith.constant 0 : i32
      %74 = tpu.memref_slice %arg15[%c3_i32_55, %c0_i32_56] : memref<8x32xf32, #tpu.memory_space<vmem>> -> memref<1x32xf32, #tpu.memory_space<vmem>>
      %75 = tpu.memref_slice %arg19[%c3_i32_53] : memref<8x!tpu.dma_semaphore, #tpu.memory_space<semaphore_mem>> -> memref<1x!tpu.dma_semaphore, #tpu.memory_space<semaphore_mem>>
      %76 = tpu.memref_squeeze %75 : memref<1x!tpu.dma_semaphore, #tpu.memory_space<semaphore_mem>> -> memref<!tpu.dma_semaphore, #tpu.memory_space<semaphore_mem>>
      tpu.wait_dma2 semaphore(%76 : memref<!tpu.dma_semaphore, #tpu.memory_space<semaphore_mem>>) src(%73 : memref<1x32xf32, #tpu.memory_space<any>>) dst(%74 : memref<1x32xf32, #tpu.memory_space<vmem>>)
      %c4_57 = arith.constant 4 : index
      %77 = memref.load %arg2[%c4_57] : memref<8xi32, #tpu.memory_space<smem>>
      %c4_i32_58 = arith.constant 4 : i32
      %c0_i32_59 = arith.constant 0 : i32
      %78 = tpu.memref_slice %arg3[%77, %c0_i32_59] : memref<64x32xf32, #tpu.memory_space<any>> -> memref<1x32xf32, #tpu.memory_space<any>>
      %c4_i32_60 = arith.constant 4 : i32
      %c0_i32_61 = arith.constant 0 : i32
      %79 = tpu.memref_slice %arg15[%c4_i32_60, %c0_i32_61] : memref<8x32xf32, #tpu.memory_space<vmem>> -> memref<1x32xf32, #tpu.memory_space<vmem>>
      %80 = tpu.memref_slice %arg19[%c4_i32_58] : memref<8x!tpu.dma_semaphore, #tpu.memory_space<semaphore_mem>> -> memref<1x!tpu.dma_semaphore, #tpu.memory_space<semaphore_mem>>
      %81 = tpu.memref_squeeze %80 : memref<1x!tpu.dma_semaphore, #tpu.memory_space<semaphore_mem>> -> memref<!tpu.dma_semaphore, #tpu.memory_space<semaphore_mem>>
      tpu.wait_dma2 semaphore(%81 : memref<!tpu.dma_semaphore, #tpu.memory_space<semaphore_mem>>) src(%78 : memref<1x32xf32, #tpu.memory_space<any>>) dst(%79 : memref<1x32xf32, #tpu.memory_space<vmem>>)
      %c5_62 = arith.constant 5 : index
      %82 = memref.load %arg2[%c5_62] : memref<8xi32, #tpu.memory_space<smem>>
      %c5_i32_63 = arith.constant 5 : i32
      %c0_i32_64 = arith.constant 0 : i32
      %83 = tpu.memref_slice %arg3[%82, %c0_i32_64] : memref<64x32xf32, #tpu.memory_space<any>> -> memref<1x32xf32, #tpu.memory_space<any>>
      %c5_i32_65 = arith.constant 5 : i32
      %c0_i32_66 = arith.constant 0 : i32
      %84 = tpu.memref_slice %arg15[%c5_i32_65, %c0_i32_66] : memref<8x32xf32, #tpu.memory_space<vmem>> -> memref<1x32xf32, #tpu.memory_space<vmem>>
      %85 = tpu.memref_slice %arg19[%c5_i32_63] : memref<8x!tpu.dma_semaphore, #tpu.memory_space<semaphore_mem>> -> memref<1x!tpu.dma_semaphore, #tpu.memory_space<semaphore_mem>>
      %86 = tpu.memref_squeeze %85 : memref<1x!tpu.dma_semaphore, #tpu.memory_space<semaphore_mem>> -> memref<!tpu.dma_semaphore, #tpu.memory_space<semaphore_mem>>
      tpu.wait_dma2 semaphore(%86 : memref<!tpu.dma_semaphore, #tpu.memory_space<semaphore_mem>>) src(%83 : memref<1x32xf32, #tpu.memory_space<any>>) dst(%84 : memref<1x32xf32, #tpu.memory_space<vmem>>)
      %c6_67 = arith.constant 6 : index
      %87 = memref.load %arg2[%c6_67] : memref<8xi32, #tpu.memory_space<smem>>
      %c6_i32_68 = arith.constant 6 : i32
      %c0_i32_69 = arith.constant 0 : i32
      %88 = tpu.memref_slice %arg3[%87, %c0_i32_69] : memref<64x32xf32, #tpu.memory_space<any>> -> memref<1x32xf32, #tpu.memory_space<any>>
      %c6_i32_70 = arith.constant 6 : i32
      %c0_i32_71 = arith.constant 0 : i32
      %89 = tpu.memref_slice %arg15[%c6_i32_70, %c0_i32_71] : memref<8x32xf32, #tpu.memory_space<vmem>> -> memref<1x32xf32, #tpu.memory_space<vmem>>
      %90 = tpu.memref_slice %arg19[%c6_i32_68] : memref<8x!tpu.dma_semaphore, #tpu.memory_space<semaphore_mem>> -> memref<1x!tpu.dma_semaphore, #tpu.memory_space<semaphore_mem>>
      %91 = tpu.memref_squeeze %90 : memref<1x!tpu.dma_semaphore, #tpu.memory_space<semaphore_mem>> -> memref<!tpu.dma_semaphore, #tpu.memory_space<semaphore_mem>>
      tpu.wait_dma2 semaphore(%91 : memref<!tpu.dma_semaphore, #tpu.memory_space<semaphore_mem>>) src(%88 : memref<1x32xf32, #tpu.memory_space<any>>) dst(%89 : memref<1x32xf32, #tpu.memory_space<vmem>>)
      %c7_72 = arith.constant 7 : index
      %92 = memref.load %arg2[%c7_72] : memref<8xi32, #tpu.memory_space<smem>>
      %c7_i32_73 = arith.constant 7 : i32
      %c0_i32_74 = arith.constant 0 : i32
      %93 = tpu.memref_slice %arg3[%92, %c0_i32_74] : memref<64x32xf32, #tpu.memory_space<any>> -> memref<1x32xf32, #tpu.memory_space<any>>
      %c7_i32_75 = arith.constant 7 : i32
      %c0_i32_76 = arith.constant 0 : i32
      %94 = tpu.memref_slice %arg15[%c7_i32_75, %c0_i32_76] : memref<8x32xf32, #tpu.memory_space<vmem>> -> memref<1x32xf32, #tpu.memory_space<vmem>>
      %95 = tpu.memref_slice %arg19[%c7_i32_73] : memref<8x!tpu.dma_semaphore, #tpu.memory_space<semaphore_mem>> -> memref<1x!tpu.dma_semaphore, #tpu.memory_space<semaphore_mem>>
      %96 = tpu.memref_squeeze %95 : memref<1x!tpu.dma_semaphore, #tpu.memory_space<semaphore_mem>> -> memref<!tpu.dma_semaphore, #tpu.memory_space<semaphore_mem>>
      tpu.wait_dma2 semaphore(%96 : memref<!tpu.dma_semaphore, #tpu.memory_space<semaphore_mem>>) src(%93 : memref<1x32xf32, #tpu.memory_space<any>>) dst(%94 : memref<1x32xf32, #tpu.memory_space<vmem>>)
      %c0_77 = arith.constant 0 : index
      %c0_78 = arith.constant 0 : index
      %97 = vector.load %arg15[%c0_77, %c0_78] : memref<8x32xf32, #tpu.memory_space<vmem>>, vector<8x32xf32>
      %c0_79 = arith.constant 0 : index
      %c0_80 = arith.constant 0 : index
      %98 = vector.load %arg4[%c0_79, %c0_80] : memref<8x32xf32, #tpu.memory_space<vmem>>, vector<8x32xf32>
      %c0_81 = arith.constant 0 : index
      %c0_82 = arith.constant 0 : index
      %c0_83 = arith.constant 0 : index
      %99 = vector.load %arg5[%c0_81, %c0_82, %c0_83] : memref<8x8x32xf32, #tpu.memory_space<vmem>>, vector<8x8x32xf32>
      %c0_84 = arith.constant 0 : index
      %c0_85 = arith.constant 0 : index
      %100 = vector.load %arg6[%c0_84, %c0_85] : memref<4x96xf32, #tpu.memory_space<vmem>>, vector<1x32xf32>
      %101 = vector.shape_cast %100 : vector<1x32xf32> to vector<1x1x32xf32>
      %102 = vector.shape_cast %98 : vector<8x32xf32> to vector<8x1x32xf32>
      %103 = vector.broadcast %102 : vector<8x1x32xf32> to vector<8x8x32xf32>
      %104 = arith.addf %99, %103 : vector<8x8x32xf32>
      %105 = math.tanh %104 : vector<8x8x32xf32>
      %106 = vector.broadcast %101 : vector<1x1x32xf32> to vector<8x8x32xf32>
      %107 = arith.mulf %105, %106 : vector<8x8x32xf32>
      %cst_86 = arith.constant dense<0.000000e+00> : vector<8x8xf32>
      %108 = vector.multi_reduction <add>, %107, %cst_86 [2] : vector<8x8x32xf32> to vector<8x8xf32>
      %cst_87 = arith.constant dense<0xFF800000> : vector<8xf32>
      %109 = vector.multi_reduction <maximumf>, %108, %cst_87 [1] : vector<8x8xf32> to vector<8xf32>
      %110 = vector.shape_cast %109 : vector<8xf32> to vector<8x1xf32>
      %111 = vector.broadcast %110 : vector<8x1xf32> to vector<8x8xf32>
      %112 = arith.subf %108, %111 : vector<8x8xf32>
      %113 = math.exp %112 : vector<8x8xf32>
      %cst_88 = arith.constant dense<0.000000e+00> : vector<8xf32>
      %114 = vector.multi_reduction <add>, %113, %cst_88 [1] : vector<8x8xf32> to vector<8xf32>
      %115 = vector.shape_cast %114 : vector<8xf32> to vector<8x1xf32>
      %116 = vector.broadcast %115 : vector<8x1xf32> to vector<8x8xf32>
      %117 = arith.divf %113, %116 : vector<8x8xf32>
      %cst_89 = arith.constant 0.000000e+00 : f32
      %118 = vector.broadcast %cst_89 : f32 to vector<8x120xf32>
      %119 = tpu.concatenate %117, %118 in 1 : vector<8x8xf32>, vector<8x120xf32> -> vector<8x128xf32>
      %c0_90 = arith.constant 0 : index
      %c0_91 = arith.constant 0 : index
      %120 = vector.load %arg14[%c0_90, %c0_91] : memref<8x128xf32, #tpu.memory_space<vmem>>, vector<8x128xf32>
      tpu.vector_store %arg14[%c0_90, %c0_91], %119 {strides = array<i32>} : memref<8x128xf32, #tpu.memory_space<vmem>>, vector<8x128xf32>,
      %121 = vector.shape_cast %117 : vector<8x8xf32> to vector<8x8x1xf32>
      %122 = vector.broadcast %121 : vector<8x8x1xf32> to vector<8x8x32xf32>
      %123 = arith.mulf %122, %99 : vector<8x8x32xf32>
      %cst_92 = arith.constant dense<0.000000e+00> : vector<8x32xf32>
      %124 = vector.multi_reduction <add>, %123, %cst_92 [1] : vector<8x8x32xf32> to vector<8x32xf32>
      %125 = tpu.concatenate %97, %124 in 1 : vector<8x32xf32>, vector<8x32xf32> -> vector<8x64xf32>
      %c0_93 = arith.constant 0 : index
      %c0_94 = arith.constant 0 : index
      %126 = vector.load %arg7[%c0_93, %c0_94] : memref<64x32xf32, #tpu.memory_space<vmem>>, vector<64x32xf32>
      %cst_95 = arith.constant dense<0.000000e+00> : vector<8x32xf32>
      %127 = tpu.matmul %125, %126, %cst_95 {dimension_numbers = #tpu.dot_dimension_numbers<[1], [0], [0], [1], [0, 0, 1, 1], [], []>} : vector<8x64xf32>, vector<64x32xf32>, vector<8x32xf32> -> vector<8x32xf32>
      %c1_96 = arith.constant 1 : index
      %c0_97 = arith.constant 0 : index
      %128 = vector.load %arg6[%c1_96, %c0_97] : memref<4x96xf32, #tpu.memory_space<vmem>>, vector<1x32xf32>
      %129 = vector.broadcast %128 : vector<1x32xf32> to vector<8x32xf32>
      %130 = arith.addf %127, %129 : vector<8x32xf32>
      %cst_98 = arith.constant 0.000000e+00 : f32
      %131 = vector.broadcast %cst_98 : f32 to vector<8x32xf32>
      %132 = arith.maximumf %130, %131 : vector<8x32xf32>
      %c0_99 = arith.constant 0 : index
      %c0_100 = arith.constant 0 : index
      %133 = vector.load %arg8[%c0_99, %c0_100] : memref<32x96xf32, #tpu.memory_space<vmem>>, vector<32x96xf32>
      %cst_101 = arith.constant dense<0.000000e+00> : vector<8x96xf32>
      %134 = tpu.matmul %132, %133, %cst_101 {dimension_numbers = #tpu.dot_dimension_numbers<[1], [0], [0], [1], [0, 0, 1, 1], [], []>} : vector<8x32xf32>, vector<32x96xf32>, vector<8x96xf32> -> vector<8x96xf32>
      %c2_102 = arith.constant 2 : index
      %c0_103 = arith.constant 0 : index
      %135 = vector.load %arg6[%c2_102, %c0_103] : memref<4x96xf32, #tpu.memory_space<vmem>>, vector<1x96xf32>
      %136 = vector.broadcast %135 : vector<1x96xf32> to vector<8x96xf32>
      %137 = arith.addf %134, %136 : vector<8x96xf32>
      %c0_104 = arith.constant 0 : index
      %c0_105 = arith.constant 0 : index
      %138 = vector.load %arg9[%c0_104, %c0_105] : memref<32x96xf32, #tpu.memory_space<vmem>>, vector<32x96xf32>
      %cst_106 = arith.constant dense<0.000000e+00> : vector<8x96xf32>
      %139 = tpu.matmul %98, %138, %cst_106 {dimension_numbers = #tpu.dot_dimension_numbers<[1], [0], [0], [1], [0, 0, 1, 1], [], []>} : vector<8x32xf32>, vector<32x96xf32>, vector<8x96xf32> -> vector<8x96xf32>
      %c3_107 = arith.constant 3 : index
      %c0_108 = arith.constant 0 : index
      %140 = vector.load %arg6[%c3_107, %c0_108] : memref<4x96xf32, #tpu.memory_space<vmem>>, vector<1x96xf32>
      %141 = vector.broadcast %140 : vector<1x96xf32> to vector<8x96xf32>
      %142 = arith.addf %139, %141 : vector<8x96xf32>
      %143 = vector.extract_strided_slice %137 {offsets = [0, 0], sizes = [8, 32], strides = [1, 1]} : vector<8x96xf32> to vector<8x32xf32>
      %144 = vector.extract_strided_slice %142 {offsets = [0, 0], sizes = [8, 32], strides = [1, 1]} : vector<8x96xf32> to vector<8x32xf32>
      %145 = arith.addf %143, %144 : vector<8x32xf32>
      %146 = arith.negf %145 : vector<8x32xf32>
      %147 = math.exp %146 : vector<8x32xf32>
      %cst_109 = arith.constant 1.000000e+00 : f32
      %148 = vector.broadcast %cst_109 : f32 to vector<8x32xf32>
      %149 = arith.addf %148, %147 : vector<8x32xf32>
      %150 = arith.divf %148, %149 : vector<8x32xf32>
      %151 = vector.extract_strided_slice %137 {offsets = [0, 32], sizes = [8, 32], strides = [1, 1]} : vector<8x96xf32> to vector<8x32xf32>
      %152 = vector.extract_strided_slice %142 {offsets = [0, 32], sizes = [8, 32], strides = [1, 1]} : vector<8x96xf32> to vector<8x32xf32>
      %153 = arith.addf %151, %152 : vector<8x32xf32>
      %154 = arith.negf %153 : vector<8x32xf32>
      %155 = math.exp %154 : vector<8x32xf32>
      %cst_110 = arith.constant 1.000000e+00 : f32
      %156 = vector.broadcast %cst_110 : f32 to vector<8x32xf32>
      %157 = arith.addf %156, %155 : vector<8x32xf32>
      %158 = arith.divf %156, %157 : vector<8x32xf32>
      %159 = vector.extract_strided_slice %137 {offsets = [0, 64], sizes = [8, 32], strides = [1, 1]} : vector<8x96xf32> to vector<8x32xf32>
      %160 = vector.extract_strided_slice %142 {offsets = [0, 64], sizes = [8, 32], strides = [1, 1]} : vector<8x96xf32> to vector<8x32xf32>
      %161 = arith.mulf %150, %160 : vector<8x32xf32>
      %162 = arith.addf %159, %161 : vector<8x32xf32>
      %163 = math.tanh %162 : vector<8x32xf32>
      %cst_111 = arith.constant 1.000000e+00 : f32
      %164 = vector.broadcast %cst_111 : f32 to vector<8x32xf32>
      %165 = arith.subf %164, %158 : vector<8x32xf32>
      %166 = arith.mulf %165, %163 : vector<8x32xf32>
      %167 = arith.mulf %158, %98 : vector<8x32xf32>
      %168 = arith.addf %166, %167 : vector<8x32xf32>
      %c0_112 = arith.constant 0 : index
      %c0_113 = arith.constant 0 : index
      %169 = vector.load %arg16[%c0_112, %c0_113] : memref<8x32xf32, #tpu.memory_space<vmem>>, vector<8x32xf32>
      tpu.vector_store %arg16[%c0_112, %c0_113], %168 {strides = array<i32>} : memref<8x32xf32, #tpu.memory_space<vmem>>, vector<8x32xf32>,
      %cst_114 = arith.constant 0.000000e+00 : f32
      %170 = vector.broadcast %cst_114 : f32 to vector<8x96xf32>
      %171 = tpu.concatenate %168, %170 in 1 : vector<8x32xf32>, vector<8x96xf32> -> vector<8x128xf32>
      %c0_115 = arith.constant 0 : index
      %c0_116 = arith.constant 0 : index
      %172 = vector.load %arg13[%c0_115, %c0_116] : memref<8x128xf32, #tpu.memory_space<vmem>>, vector<8x128xf32>
      tpu.vector_store %arg13[%c0_115, %c0_116], %171 {strides = array<i32>} : memref<8x128xf32, #tpu.memory_space<vmem>>, vector<8x128xf32>,
      %cst_117 = arith.constant 0xFF800000 : f32
      %173 = vector.broadcast %cst_117 : f32 to vector<8x1xf32>
      %c0_118 = arith.constant 0 : index
      %c0_119 = arith.constant 0 : index
      %174 = vector.load %arg17[%c0_118, %c0_119] : memref<8x1xf32, #tpu.memory_space<vmem>>, vector<8x1xf32>
      tpu.vector_store %arg17[%c0_118, %c0_119], %173 {strides = array<i32>} : memref<8x1xf32, #tpu.memory_space<vmem>>, vector<8x1xf32>,
      %cst_120 = arith.constant 0.000000e+00 : f32
      %175 = vector.broadcast %cst_120 : f32 to vector<8x1xf32>
      %c0_121 = arith.constant 0 : index
      %c0_122 = arith.constant 0 : index
      %176 = vector.load %arg18[%c0_121, %c0_122] : memref<8x1xf32, #tpu.memory_space<vmem>>, vector<8x1xf32>
      tpu.vector_store %arg18[%c0_121, %c0_122], %175 {strides = array<i32>} : memref<8x1xf32, #tpu.memory_space<vmem>>, vector<8x1xf32>,
    } else {
    }
    %c0 = arith.constant 0 : index
    %c0_2 = arith.constant 0 : index
    %5 = vector.load %arg16[%c0, %c0_2] : memref<8x32xf32, #tpu.memory_space<vmem>>, vector<8x32xf32>
    %c0_3 = arith.constant 0 : index
    %c0_4 = arith.constant 0 : index
    %6 = vector.load %arg10[%c0_3, %c0_4] : memref<32x128xf32, #tpu.memory_space<vmem>>, vector<32x128xf32>
    %cst = arith.constant dense<0.000000e+00> : vector<8x128xf32>
    %7 = tpu.matmul %5, %6, %cst {dimension_numbers = #tpu.dot_dimension_numbers<[1], [0], [0], [1], [0, 0, 1, 1], [], []>} : vector<8x32xf32>, vector<32x128xf32>, vector<8x128xf32> -> vector<8x128xf32>
    %c0_5 = arith.constant 0 : index
    %c0_6 = arith.constant 0 : index
    %8 = vector.load %arg11[%c0_5, %c0_6] : memref<1x128xf32, #tpu.memory_space<vmem>>, vector<1x128xf32>
    %9 = vector.broadcast %8 : vector<1x128xf32> to vector<8x128xf32>
    %10 = arith.addf %7, %9 : vector<8x128xf32>
    %c0_i32_7 = arith.constant 0 : i32
    %11 = arith.cmpi eq, %arg0, %c0_i32_7 : i32
    %12 = arith.extui %11 : i1 to i32
    %c0_i32_8 = arith.constant 0 : i32
    %13 = arith.cmpi ne, %12, %c0_i32_8 : i32
    scf.if %13 {
      %c0_10 = arith.constant 0 : index
      %c0_11 = arith.constant 0 : index
      %17 = vector.load %arg17[%c0_10, %c0_11] : memref<8x1xf32, #tpu.memory_space<vmem>>, vector<8x1xf32>
      %cst_12 = arith.constant dense<0xFF800000> : vector<8xf32>
      %18 = vector.multi_reduction <maximumf>, %10, %cst_12 [1] : vector<8x128xf32> to vector<8xf32>
      %19 = vector.shape_cast %18 : vector<8xf32> to vector<8x1xf32>
      %20 = arith.maximumf %17, %19 : vector<8x1xf32>
      %c0_13 = arith.constant 0 : index
      %c0_14 = arith.constant 0 : index
      %21 = vector.load %arg18[%c0_13, %c0_14] : memref<8x1xf32, #tpu.memory_space<vmem>>, vector<8x1xf32>
      %22 = arith.subf %17, %20 : vector<8x1xf32>
      %23 = math.exp %22 : vector<8x1xf32>
      %24 = arith.mulf %21, %23 : vector<8x1xf32>
      %25 = vector.broadcast %20 : vector<8x1xf32> to vector<8x128xf32>
      %26 = arith.subf %10, %25 : vector<8x128xf32>
      %27 = math.exp %26 : vector<8x128xf32>
      %cst_15 = arith.constant dense<0.000000e+00> : vector<8xf32>
      %28 = vector.multi_reduction <add>, %27, %cst_15 [1] : vector<8x128xf32> to vector<8xf32>
      %29 = vector.shape_cast %28 : vector<8xf32> to vector<8x1xf32>
      %30 = arith.addf %24, %29 : vector<8x1xf32>
      %c0_16 = arith.constant 0 : index
      %c0_17 = arith.constant 0 : index
      %31 = vector.load %arg18[%c0_16, %c0_17] : memref<8x1xf32, #tpu.memory_space<vmem>>, vector<8x1xf32>
      tpu.vector_store %arg18[%c0_16, %c0_17], %30 {strides = array<i32>} : memref<8x1xf32, #tpu.memory_space<vmem>>, vector<8x1xf32>,
      %c0_18 = arith.constant 0 : index
      %c0_19 = arith.constant 0 : index
      %32 = vector.load %arg17[%c0_18, %c0_19] : memref<8x1xf32, #tpu.memory_space<vmem>>, vector<8x1xf32>
      tpu.vector_store %arg17[%c0_18, %c0_19], %20 {strides = array<i32>} : memref<8x1xf32, #tpu.memory_space<vmem>>, vector<8x1xf32>,
    } else {
    }
    %c1_i32 = arith.constant 1 : i32
    %14 = arith.cmpi eq, %arg0, %c1_i32 : i32
    %15 = arith.extui %14 : i1 to i32
    %c0_i32_9 = arith.constant 0 : i32
    %16 = arith.cmpi ne, %15, %c0_i32_9 : i32
    scf.if %16 {
      %c0_10 = arith.constant 0 : index
      %c0_11 = arith.constant 0 : index
      %17 = vector.load %arg17[%c0_10, %c0_11] : memref<8x1xf32, #tpu.memory_space<vmem>>, vector<8x1xf32>
      %c0_12 = arith.constant 0 : index
      %c0_13 = arith.constant 0 : index
      %18 = vector.load %arg18[%c0_12, %c0_13] : memref<8x1xf32, #tpu.memory_space<vmem>>, vector<8x1xf32>
      %19 = math.log %18 : vector<8x1xf32>
      %20 = arith.addf %17, %19 : vector<8x1xf32>
      %21 = vector.broadcast %20 : vector<8x1xf32> to vector<8x128xf32>
      %22 = arith.subf %10, %21 : vector<8x128xf32>
      %c0_14 = arith.constant 0 : index
      %c0_15 = arith.constant 0 : index
      %23 = vector.load %arg12[%c0_14, %c0_15] : memref<8x128xf32, #tpu.memory_space<vmem>>, vector<8x128xf32>
      tpu.vector_store %arg12[%c0_14, %c0_15], %22 {strides = array<i32>} : memref<8x128xf32, #tpu.memory_space<vmem>>, vector<8x128xf32>,
    } else {
    }
    return
  }
  func.func @transform_1(%arg0: i32, %arg1: i32, %arg2: memref<8xi32, #tpu.memory_space<smem>>) -> (i32, i32) {
    %c0_i32 = arith.constant 0 : i32
    %c0_i32_0 = arith.constant 0 : i32
    %c0_i32_1 = arith.constant 0 : i32
    return %c0_i32, %c0_i32_0 : i32, i32
  }
  func.func @transform_2(%arg0: i32, %arg1: i32, %arg2: memref<8xi32, #tpu.memory_space<smem>>) -> (i32, i32, i32) {
    %c0_i32 = arith.constant 0 : i32
    %c0_i32_0 = arith.constant 0 : i32
    %c0_i32_1 = arith.constant 0 : i32
    %c0_i32_2 = arith.constant 0 : i32
    return %c0_i32, %c0_i32_0, %c0_i32_1 : i32, i32, i32
  }
  func.func @transform_3(%arg0: i32, %arg1: i32, %arg2: memref<8xi32, #tpu.memory_space<smem>>) -> (i32, i32) {
    %c0_i32 = arith.constant 0 : i32
    %c0_i32_0 = arith.constant 0 : i32
    %c0_i32_1 = arith.constant 0 : i32
    return %c0_i32, %c0_i32_0 : i32, i32
  }
  func.func @transform_4(%arg0: i32, %arg1: i32, %arg2: memref<8xi32, #tpu.memory_space<smem>>) -> (i32, i32) {
    %c0_i32 = arith.constant 0 : i32
    %c0_i32_0 = arith.constant 0 : i32
    %c0_i32_1 = arith.constant 0 : i32
    return %c0_i32, %c0_i32_0 : i32, i32
  }
  func.func @transform_5(%arg0: i32, %arg1: i32, %arg2: memref<8xi32, #tpu.memory_space<smem>>) -> (i32, i32) {
    %c0_i32 = arith.constant 0 : i32
    %c0_i32_0 = arith.constant 0 : i32
    %c0_i32_1 = arith.constant 0 : i32
    return %c0_i32, %c0_i32_0 : i32, i32
  }
  func.func @transform_6(%arg0: i32, %arg1: i32, %arg2: memref<8xi32, #tpu.memory_space<smem>>) -> (i32, i32) {
    %c0_i32 = arith.constant 0 : i32
    %c0_i32_0 = arith.constant 0 : i32
    %c0_i32_1 = arith.constant 0 : i32
    return %c0_i32, %c0_i32_0 : i32, i32
  }
  func.func @transform_7(%arg0: i32, %arg1: i32, %arg2: memref<8xi32, #tpu.memory_space<smem>>) -> (i32, i32) {
    %c0_i32 = arith.constant 0 : i32
    %c0_i32_0 = arith.constant 0 : i32
    return %c0_i32, %arg1 : i32, i32
  }
  func.func @transform_8(%arg0: i32, %arg1: i32, %arg2: memref<8xi32, #tpu.memory_space<smem>>) -> (i32, i32) {
    %c0_i32 = arith.constant 0 : i32
    %c0_i32_0 = arith.constant 0 : i32
    return %c0_i32, %arg1 : i32, i32
  }
  func.func @transform_9(%arg0: i32, %arg1: i32, %arg2: memref<8xi32, #tpu.memory_space<smem>>) -> (i32, i32) {
    %c0_i32 = arith.constant 0 : i32
    %c0_i32_0 = arith.constant 0 : i32
    return %c0_i32, %arg1 : i32, i32
  }
  func.func @transform_10(%arg0: i32, %arg1: i32, %arg2: memref<8xi32, #tpu.memory_space<smem>>) -> (i32, i32) {
    %c0_i32 = arith.constant 0 : i32
    %c0_i32_0 = arith.constant 0 : i32
    %c0_i32_1 = arith.constant 0 : i32
    return %c0_i32, %c0_i32_0 : i32, i32
  }
  func.func @transform_11(%arg0: i32, %arg1: i32, %arg2: memref<8xi32, #tpu.memory_space<smem>>) -> (i32, i32) {
    %c0_i32 = arith.constant 0 : i32
    %c0_i32_0 = arith.constant 0 : i32
    %c0_i32_1 = arith.constant 0 : i32
    return %c0_i32, %c0_i32_0 : i32, i32
  }
}

</mosaic_0001>

<llo_original>
// kernel: attention_decoder_v2.1
$region0: #{attention_decoder_v2.1}
  #allocation0 [shape = 'u32[]', space=smem, size = 0x4, offset = 0x4, fixed_abs, tag = 'smem constant byte address 0x4 - core index']
  #allocation1 [shape = 'u32[144,128]{1,0:T(1,128)}', space=vmem, size = 0x12000, scoped, tag = 'internal scratch']
  #allocation2 [shape = 'f32[8,32]{1,0:T(8,128)}', space=vmem, size = 0x1000, scoped, tag = 'scratch operand']
  #allocation3 [shape = 'f32[8,32]{1,0:T(8,128)}', space=vmem, size = 0x1000, scoped, tag = 'scratch operand']
  #allocation4 [shape = 'f32[8,1]{1,0:T(8,128)}', space=vmem, size = 0x1000, scoped, tag = 'scratch operand']
  #allocation5 [shape = 'f32[8,1]{1,0:T(8,128)}', space=vmem, size = 0x1000, scoped, tag = 'scratch operand']
  #allocation6 [shape = 's32[8]{0}', space=sflag, size = 0x20, scoped, tag = 'scratch operand']
  #allocation7 [shape = 's32[1]{0}', space=sflag, size = 0x4, scoped, tag = 'scoped memory for attention_decoder_v2.1']
  #allocation8 [shape = 'u8[512]{0}', space=smem, size = 0x200, scoped, tag = 'prefetched SMEM operand 0']
  #allocation9 [shape = 's32[]', space=sflag, size = 0x4, offset = 0, fixed_abs, tag = 'sflag constant byte address 0x0 - dummy sync flag']
  #allocation10 [shape = 's32[]', space=sflag, size = 0x4, offset = 0, fixed_abs, tag = 'sflag constant byte address 0x0 - dummy sync flag']
  #allocation11 [shape = 's32[]', space=sflag, size = 0x4, offset = 0, fixed_abs, tag = 'sflag constant byte address 0x0 - dummy sync flag']
  #allocation12 [shape = 's32[]', space=sflag, size = 0x4, offset = 0, fixed_abs, tag = 'sflag constant byte address 0x0 - dummy sync flag']
  #allocation13 [shape = 's32[]', space=sflag, size = 0x4, offset = 0, fixed_abs, tag = 'sflag constant byte address 0x0 - dummy sync flag']
  #allocation14 [shape = 's32[]', space=sflag, size = 0x4, offset = 0, fixed_abs, tag = 'sflag constant byte address 0x0 - dummy sync flag']
  #allocation15 [shape = 's32[]', space=sflag, size = 0x4, offset = 0, fixed_abs, tag = 'sflag constant byte address 0x0 - dummy sync flag']
  #allocation16 [shape = 's32[]', space=sflag, size = 0x4, offset = 0, fixed_abs, tag = 'sflag constant byte address 0x0 - dummy sync flag']
  %s0 = inlined_call_operand.vmem [shape: s32[8], index: 0, kind: input, shape index: {}]
  %s1 = inlined_call_operand.vmem [shape: f32[64,32], index: 1, kind: input, shape index: {}]
  %s2 = inlined_call_operand.vmem [shape: f32[8,32], index: 2, kind: input, shape index: {}]
  %s3 = inlined_call_operand.vmem [shape: f32[8,8,32], index: 3, kind: input, shape index: {}]
  %s4 = inlined_call_operand.vmem [shape: f32[4,96], index: 4, kind: input, shape index: {}]
  %s5 = inlined_call_operand.vmem [shape: f32[64,32], index: 5, kind: input, shape index: {}]
  %s6 = inlined_call_operand.vmem [shape: f32[32,96], index: 6, kind: input, shape index: {}]
  %s7 = inlined_call_operand.vmem [shape: f32[32,96], index: 7, kind: input, shape index: {}]
  %s8 = inlined_call_operand.vmem [shape: f32[32,128], index: 8, kind: input, shape index: {}]
  %s9 = inlined_call_operand.vmem [shape: f32[1,128], index: 9, kind: input, shape index: {}]
  %s10 = inlined_call_operand.vmem [shape: f32[8,128], index: 10, kind: output, shape index: {0}]
  %s11 = inlined_call_operand.vmem [shape: f32[8,128], index: 11, kind: output, shape index: {1}]
  %s12 = inlined_call_operand.vmem [shape: f32[8,128], index: 12, kind: output, shape index: {2}]
  %13 = xla_tuple %s10, %s11, %s12
  %s14 = sld [smem:[#allocation0]]
  $region333: #{attention_decoder_v2.1} parent=0
    _
  %s16 = ssub.s32 1, %s14
  %s17 = scalar_select 0, %s16, %s14
  %s18 = sshll.u32 %s0, 4
  %s19 = int_to_ptr.vmem [resolvable:$true] %s18
  %21 = dma.vmem_to_smem %s19, 16, [#allocation8], [#allocation7]
  %22 = dma.done [#allocation7], 16
  %23 = sfence
  loop: start=0, step=1, limit=4
  $region2: #{attention_decoder_v2.1} parent=0 // loop_pre_header
    _
  $region3: #{attention_decoder_v2.1} parent=0 // loop_header
    %s25 = sphi 0, %s29
    %p26 = scmp.ge.s32.totalorder %s25, 4
    %s32 = sphi 0, %s44
    %s33 = sphi 0, %s40
    %s34 = sphi 0, %s32
    %s35 = sphi 0, %s33
    %s36 = sphi 0, %s34
    %s37 = sphi 0, %s35
    %s45 = sphi 0, %s45
    %s47 = sphi 0, %s45
    %s48 = sphi 0, %s47
    %s62 = sphi 0, %s48
    %s66 = sphi 0, %s66
    %s68 = sphi 0, %s66
    %s69 = sphi 0, %s68
    %s83 = sphi 0, %s69
    %s87 = sphi 0, %s87
    %s89 = sphi 0, %s87
    %s90 = sphi 0, %s89
    %s104 = sphi 0, %s90
    %s108 = sphi 0, %s108
    %s110 = sphi 0, %s108
    %s111 = sphi 0, %s110
    %s125 = sphi 0, %s111
    %s129 = sphi 0, %s129
    %s131 = sphi 0, %s129
    %s132 = sphi 0, %s131
    %s146 = sphi 0, %s132
    %s150 = sphi 0, %s150
    %s152 = sphi 0, %s150
    %s153 = sphi 0, %s152
    %s167 = sphi 0, %s153
    %s173 = sphi 0, %s175
    %s176 = sphi 0, %s173
    %s177 = sphi 0, %s176
    %s193 = sphi 0, %s177
    %s199 = sphi 0, %s201
    %s202 = sphi 0, %s199
    %s203 = sphi 0, %s202
    %s219 = sphi 0, %s203
    %s225 = sphi 0, %s227
    %s228 = sphi 0, %s225
    %s229 = sphi 0, %s228
    %s245 = sphi 0, %s229
    %s249 = sphi 0, %s249
    %s251 = sphi 0, %s249
    %s252 = sphi 0, %s251
    %s266 = sphi 0, %s252
    %s270 = sphi 0, %s270
    %s272 = sphi 0, %s270
    %s273 = sphi 0, %s272
    %s287 = sphi 0, %s273
  $region4: #{attention_decoder_v2.1} parent=0 // loop_header_branch
    %28 = sbr.rel (%p26) target = $region8
  $region5: #{attention_decoder_v2.1} parent=0 // loop_body
    %s30 = ssub.s32 %s25, 1
    %s31 = ssub.s32 %s25, 2
    %s38 = sadd.s32 1, %s33
    %p39 = scmp.ge.s32.totalorder %s38, 1
    %s40 = scalar_select %p39, 0, %s38
    %s41 = sadd.s32 1, %s32
    %s42 = scalar_select %p39, %s41, %s32
    %p43 = scmp.ge.s32.totalorder %s42, 2
    %s44 = scalar_select %p43, 0, %s42
    %s46 = sadd.s32 %s45, 1
    %p49 = scmp.eq.s32.totalorder %s25, 1
    %p50 = scmp.ne.s32.totalorder %s45, %s47
    %p51 = scmp.eq.s32.totalorder %s25, 0
    %p52 = por %p50, %p51
    %p53 = scmp.ne.s32.totalorder %s45, %s47
    %p54 = scmp.eq.s32.totalorder %s30, 1
    %p55 = por %p53, %p54
    %p56 = scmp.ne.s32.totalorder %s47, %s48
    %p57 = scmp.eq.s32.totalorder %s30, 0
    %p58 = por %p56, %p57
    %p59 = scmp.ne.s32.totalorder %s47, %s48
    %p60 = scmp.eq.s32.totalorder %s31, 1
    %p61 = por %p59, %p60
    %p63 = scmp.ne.s32.totalorder %s48, %s62
    %p64 = scmp.eq.s32.totalorder %s31, 0
    %p65 = por %p63, %p64
    %s67 = sadd.s32 %s66, 1
    %p70 = scmp.eq.s32.totalorder %s25, 1
    %p71 = scmp.ne.s32.totalorder %s66, %s68
    %p72 = scmp.eq.s32.totalorder %s25, 0
    %p73 = por %p71, %p72
    %p74 = scmp.ne.s32.totalorder %s66, %s68
    %p75 = scmp.eq.s32.totalorder %s30, 1
    %p76 = por %p74, %p75
    %p77 = scmp.ne.s32.totalorder %s68, %s69
    %p78 = scmp.eq.s32.totalorder %s30, 0
    %p79 = por %p77, %p78
    %p80 = scmp.ne.s32.totalorder %s68, %s69
    %p81 = scmp.eq.s32.totalorder %s31, 1
    %p82 = por %p80, %p81
    %p84 = scmp.ne.s32.totalorder %s69, %s83
    %p85 = scmp.eq.s32.totalorder %s31, 0
    %p86 = por %p84, %p85
    %s88 = sadd.s32 %s87, 1
    %p91 = scmp.eq.s32.totalorder %s25, 1
    %p92 = scmp.ne.s32.totalorder %s87, %s89
    %p93 = scmp.eq.s32.totalorder %s25, 0
    %p94 = por %p92, %p93
    %p95 = scmp.ne.s32.totalorder %s87, %s89
    %p96 = scmp.eq.s32.totalorder %s30, 1
    %p97 = por %p95, %p96
    %p98 = scmp.ne.s32.totalorder %s89, %s90
    %p99 = scmp.eq.s32.totalorder %s30, 0
    %p100 = por %p98, %p99
    %p101 = scmp.ne.s32.totalorder %s89, %s90
    %p102 = scmp.eq.s32.totalorder %s31, 1
    %p103 = por %p101, %p102
    %p105 = scmp.ne.s32.totalorder %s90, %s104
    %p106 = scmp.eq.s32.totalorder %s31, 0
    %p107 = por %p105, %p106
    %s109 = sadd.s32 %s108, 1
    %p112 = scmp.eq.s32.totalorder %s25, 1
    %p113 = scmp.ne.s32.totalorder %s108, %s110
    %p114 = scmp.eq.s32.totalorder %s25, 0
    %p115 = por %p113, %p114
    %p116 = scmp.ne.s32.totalorder %s108, %s110
    %p117 = scmp.eq.s32.totalorder %s30, 1
    %p118 = por %p116, %p117
    %p119 = scmp.ne.s32.totalorder %s110, %s111
    %p120 = scmp.eq.s32.totalorder %s30, 0
    %p121 = por %p119, %p120
    %p122 = scmp.ne.s32.totalorder %s110, %s111
    %p123 = scmp.eq.s32.totalorder %s31, 1
    %p124 = por %p122, %p123
    %p126 = scmp.ne.s32.totalorder %s111, %s125
    %p127 = scmp.eq.s32.totalorder %s31, 0
    %p128 = por %p126, %p127
    %s130 = sadd.s32 %s129, 1
    %p133 = scmp.eq.s32.totalorder %s25, 1
    %p134 = scmp.ne.s32.totalorder %s129, %s131
    %p135 = scmp.eq.s32.totalorder %s25, 0
    %p136 = por %p134, %p135
    %p137 = scmp.ne.s32.totalorder %s129, %s131
    %p138 = scmp.eq.s32.totalorder %s30, 1
    %p139 = por %p137, %p138
    %p140 = scmp.ne.s32.totalorder %s131, %s132
    %p141 = scmp.eq.s32.totalorder %s30, 0
    %p142 = por %p140, %p141
    %p143 = scmp.ne.s32.totalorder %s131, %s132
    %p144 = scmp.eq.s32.totalorder %s31, 1
    %p145 = por %p143, %p144
    %p147 = scmp.ne.s32.totalorder %s132, %s146
    %p148 = scmp.eq.s32.totalorder %s31, 0
    %p149 = por %p147, %p148
    %s151 = sadd.s32 %s150, 1
    %p154 = scmp.eq.s32.totalorder %s25, 1
    %p155 = scmp.ne.s32.totalorder %s150, %s152
    %p156 = scmp.eq.s32.totalorder %s25, 0
    %p157 = por %p155, %p156
    %p158 = scmp.ne.s32.totalorder %s150, %s152
    %p159 = scmp.eq.s32.totalorder %s30, 1
    %p160 = por %p158, %p159
    %p161 = scmp.ne.s32.totalorder %s152, %s153
    %p162 = scmp.eq.s32.totalorder %s30, 0
    %p163 = por %p161, %p162
    %p164 = scmp.ne.s32.totalorder %s152, %s153
    %p165 = scmp.eq.s32.totalorder %s31, 1
    %p166 = por %p164, %p165
    %p168 = scmp.ne.s32.totalorder %s153, %s167
    %p169 = scmp.eq.s32.totalorder %s31, 0
    %p170 = por %p168, %p169
    %s171 = ssub.s32 %s33, %s40
    %p172 = scmp.eq.s32.totalorder %s171, 0
    %s174 = sadd.s32 %s173, 1
    %s175 = scalar_select %p172, %s173, %s174
    %p178 = pneg %p172
    %p179 = scmp.eq.s32.totalorder %s25, 1
    %p180 = por %p178, %p179
    %p181 = scmp.ne.s32.totalorder %s173, %s176
    %p182 = scmp.eq.s32.totalorder %s25, 0
    %p183 = por %p181, %p182
    %p184 = scmp.ne.s32.totalorder %s173, %s176
    %p185 = scmp.eq.s32.totalorder %s30, 1
    %p186 = por %p184, %p185
    %p187 = scmp.ne.s32.totalorder %s176, %s177
    %p188 = scmp.eq.s32.totalorder %s30, 0
    %p189 = por %p187, %p188
    %p190 = scmp.ne.s32.totalorder %s176, %s177
    %p191 = scmp.eq.s32.totalorder %s31, 1
    %p192 = por %p190, %p191
    %p194 = scmp.ne.s32.totalorder %s177, %s193
    %p195 = scmp.eq.s32.totalorder %s31, 0
    %p196 = por %p194, %p195
    %s197 = ssub.s32 %s33, %s40
    %p198 = scmp.eq.s32.totalorder %s197, 0
    %s200 = sadd.s32 %s199, 1
    %s201 = scalar_select %p198, %s199, %s200
    %p204 = pneg %p198
    %p205 = scmp.eq.s32.totalorder %s25, 1
    %p206 = por %p204, %p205
    %p207 = scmp.ne.s32.totalorder %s199, %s202
    %p208 = scmp.eq.s32.totalorder %s25, 0
    %p209 = por %p207, %p208
    %p210 = scmp.ne.s32.totalorder %s199, %s202
    %p211 = scmp.eq.s32.totalorder %s30, 1
    %p212 = por %p210, %p211
    %p213 = scmp.ne.s32.totalorder %s202, %s203
    %p214 = scmp.eq.s32.totalorder %s30, 0
    %p215 = por %p213, %p214
    %p216 = scmp.ne.s32.totalorder %s202, %s203
    %p217 = scmp.eq.s32.totalorder %s31, 1
    %p218 = por %p216, %p217
    %p220 = scmp.ne.s32.totalorder %s203, %s219
    %p221 = scmp.eq.s32.totalorder %s31, 0
    %p222 = por %p220, %p221
    %s223 = ssub.s32 %s33, %s40
    %p224 = scmp.eq.s32.totalorder %s223, 0
    %s226 = sadd.s32 %s225, 1
    %s227 = scalar_select %p224, %s225, %s226
    %p230 = pneg %p224
    %p231 = scmp.eq.s32.totalorder %s25, 1
    %p232 = por %p230, %p231
    %p233 = scmp.ne.s32.totalorder %s225, %s228
    %p234 = scmp.eq.s32.totalorder %s25, 0
    %p235 = por %p233, %p234
    %p236 = scmp.ne.s32.totalorder %s225, %s228
    %p237 = scmp.eq.s32.totalorder %s30, 1
    %p238 = por %p236, %p237
    %p239 = scmp.ne.s32.totalorder %s228, %s229
    %p240 = scmp.eq.s32.totalorder %s30, 0
    %p241 = por %p239, %p240
    %p242 = scmp.ne.s32.totalorder %s228, %s229
    %p243 = scmp.eq.s32.totalorder %s31, 1
    %p244 = por %p242, %p243
    %p246 = scmp.ne.s32.totalorder %s229, %s245
    %p247 = scmp.eq.s32.totalorder %s31, 0
    %p248 = por %p246, %p247
    %s250 = sadd.s32 %s249, 1
    %p253 = scmp.eq.s32.totalorder %s25, 1
    %p254 = scmp.ne.s32.totalorder %s249, %s251
    %p255 = scmp.eq.s32.totalorder %s25, 0
    %p256 = por %p254, %p255
    %p257 = scmp.ne.s32.totalorder %s249, %s251
    %p258 = scmp.eq.s32.totalorder %s30, 1
    %p259 = por %p257, %p258
    %p260 = scmp.ne.s32.totalorder %s251, %s252
    %p261 = scmp.eq.s32.totalorder %s30, 0
    %p262 = por %p260, %p261
    %p263 = scmp.ne.s32.totalorder %s251, %s252
    %p264 = scmp.eq.s32.totalorder %s31, 1
    %p265 = por %p263, %p264
    %p267 = scmp.ne.s32.totalorder %s252, %s266
    %p268 = scmp.eq.s32.totalorder %s31, 0
    %p269 = por %p267, %p268
    %s271 = sadd.s32 %s270, 1
    %p274 = scmp.eq.s32.totalorder %s25, 1
    %p275 = scmp.ne.s32.totalorder %s270, %s272
    %p276 = scmp.eq.s32.totalorder %s25, 0
    %p277 = por %p275, %p276
    %p278 = scmp.ne.s32.totalorder %s270, %s272
    %p279 = scmp.eq.s32.totalorder %s30, 1
    %p280 = por %p278, %p279
    %p281 = scmp.ne.s32.totalorder %s272, %s273
    %p282 = scmp.eq.s32.totalorder %s30, 0
    %p283 = por %p281, %p282
    %p284 = scmp.ne.s32.totalorder %s272, %s273
    %p285 = scmp.eq.s32.totalorder %s31, 1
    %p286 = por %p284, %p285
    %p288 = scmp.ne.s32.totalorder %s273, %s287
    %p289 = scmp.eq.s32.totalorder %s31, 0
    %p290 = por %p288, %p289
    %p291 = scmp.le.s32.totalorder 1, %s25
    %p292 = scmp.lt.s32.totalorder %s25, 3
    %p293 = pnand %p291, %p292
    %p294 = pneg %p293
    // Predicated region
    $region9: #{attention_decoder_v2.1} parent=5 // pred_check
      _
    $region10: #{attention_decoder_v2.1} parent=5 // pred_check_branch
      %296 = sbr.rel (%p293) target = $region12
    $region11: #{attention_decoder_v2.1} parent=5 // pred_region
      %s297 = ssub.s32 %s25, 1
      // Predicated region
      $region13: #{attention_decoder_v2.1} parent=11 // pred_check
        %p298 = pneg %p58
      $region14: #{attention_decoder_v2.1} parent=11 // pred_check_branch
        %300 = sbr.rel (%p298) target = $region16
      $region15: #{attention_decoder_v2.1} parent=11 // pred_region
        _
      $region16: #{attention_decoder_v2.1} parent=11 // pred_fallthru
        _
      // Predicated region
      $region17: #{attention_decoder_v2.1} parent=11 // pred_check
        %p301 = pneg %p79
      $region18: #{attention_decoder_v2.1} parent=11 // pred_check_branch
        %303 = sbr.rel (%p301) target = $region20
      $region19: #{attention_decoder_v2.1} parent=11 // pred_region
        _
      $region20: #{attention_decoder_v2.1} parent=11 // pred_fallthru
        _
      // Predicated region
      $region21: #{attention_decoder_v2.1} parent=11 // pred_check
        %p304 = pneg %p100
      $region22: #{attention_decoder_v2.1} parent=11 // pred_check_branch
        %306 = sbr.rel (%p304) target = $region24
      $region23: #{attention_decoder_v2.1} parent=11 // pred_region
        _
      $region24: #{attention_decoder_v2.1} parent=11 // pred_fallthru
        _
      // Predicated region
      $region25: #{attention_decoder_v2.1} parent=11 // pred_check
        %p307 = pneg %p121
      $region26: #{attention_decoder_v2.1} parent=11 // pred_check_branch
        %309 = sbr.rel (%p307) target = $region28
      $region27: #{attention_decoder_v2.1} parent=11 // pred_region
        _
      $region28: #{attention_decoder_v2.1} parent=11 // pred_fallthru
        _
      // Predicated region
      $region29: #{attention_decoder_v2.1} parent=11 // pred_check
        %p310 = pneg %p142
      $region30: #{attention_decoder_v2.1} parent=11 // pred_check_branch
        %312 = sbr.rel (%p310) target = $region32
      $region31: #{attention_decoder_v2.1} parent=11 // pred_region
        _
      $region32: #{attention_decoder_v2.1} parent=11 // pred_fallthru
        _
      // Predicated region
      $region33: #{attention_decoder_v2.1} parent=11 // pred_check
        %p313 = pneg %p163
      $region34: #{attention_decoder_v2.1} parent=11 // pred_check_branch
        %315 = sbr.rel (%p313) target = $region36
      $region35: #{attention_decoder_v2.1} parent=11 // pred_region
        _
      $region36: #{attention_decoder_v2.1} parent=11 // pred_fallthru
        _
      // Predicated region
      $region37: #{attention_decoder_v2.1} parent=11 // pred_check
        %p316 = pneg %p189
      $region38: #{attention_decoder_v2.1} parent=11 // pred_check_branch
        %318 = sbr.rel (%p316) target = $region40
      $region39: #{attention_decoder_v2.1} parent=11 // pred_region
        %p319 = scmp.lt.s32.totalorder %s35, 0
        %s320 = scalar_select %p319, %s35, 0
        %s321 = smul.addr %s320, 8
        %s322 = scalar_lea.vmem %s8, %s321
      $region40: #{attention_decoder_v2.1} parent=11 // pred_fallthru
        _
      // Predicated region
      $region41: #{attention_decoder_v2.1} parent=11 // pred_check
        %p323 = pneg %p215
      $region42: #{attention_decoder_v2.1} parent=11 // pred_check_branch
        %325 = sbr.rel (%p323) target = $region44
      $region43: #{attention_decoder_v2.1} parent=11 // pred_region
        %p326 = scmp.lt.s32.totalorder %s35, 0
        %s327 = scalar_select %p326, %s35, 0
        %s328 = scalar_lea.vmem %s9, %s327
      $region44: #{attention_decoder_v2.1} parent=11 // pred_fallthru
        _
    $region12: #{attention_decoder_v2.1} parent=5 // pred_fallthru
      _
    %p329 = scmp.lt.s32.totalorder %s25, 2
    // Predicated region
    $region45: #{attention_decoder_v2.1} parent=5 // pred_check
      %p330 = pneg %p329
    $region46: #{attention_decoder_v2.1} parent=5 // pred_check_branch
      %332 = sbr.rel (%p330) target = $region48
    $region47: #{attention_decoder_v2.1} parent=5 // pred_region
      _
    $region48: #{attention_decoder_v2.1} parent=5 // pred_fallthru
      _
    %p333 = scmp.le.s32.totalorder 1, %s25
    %p334 = scmp.lt.s32.totalorder %s25, 3
    %p335 = pnand %p333, %p334
    %p336 = pneg %p335
    // Predicated region
    $region49: #{attention_decoder_v2.1} parent=5 // pred_check
      _
    $region50: #{attention_decoder_v2.1} parent=5 // pred_check_branch
      %338 = sbr.rel (%p335) target = $region52
    $region51: #{attention_decoder_v2.1} parent=5 // pred_region
      %s339 = ssub.s32 %s25, 1
      %p340 = pneg %p58
      %p341 = pneg %p55
      %p342 = pneg %p79
      %p343 = pneg %p76
      %p344 = pneg %p100
      %p345 = pneg %p97
      %p346 = pneg %p121
      %p347 = pneg %p118
      %p348 = pneg %p142
      %p349 = pneg %p139
      %p350 = pneg %p163
      %p351 = pneg %p160
      %p352 = scmp.lt.s32.totalorder %s35, 0
      %s353 = scalar_select %p352, %s35, 0
      %s354 = smul.addr %s353, 8
      %s355 = scalar_lea.vmem %s8, %s354
      %p356 = pneg %p189
      %p357 = pneg %p186
      %p358 = scmp.lt.s32.totalorder %s35, 0
      %s359 = scalar_select %p358, %s35, 0
      %s360 = scalar_lea.vmem %s9, %s359
      %p361 = pneg %p215
      %p362 = pneg %p212
      %p363 = pneg %p241
      %p364 = pneg %p238
      %p365 = scmp.lt.s32.totalorder %s35, 0
      %s366 = scalar_select %p365, %s35, 0
      %s367 = smul.addr %s366, 8
      %s368 = scalar_lea.vmem %s10, %s367
      %p369 = pneg %p262
      %p370 = pneg %p259
      %p371 = pneg %p283
      %p372 = pneg %p280
      %p373 = scmp.lt.s32.totalorder %s35, 0
      %s374 = scalar_select %p373, %s35, 0
      %s375 = smul.addr %s374, 8
      %s376 = scalar_lea.vmem %s8, %s375
      %p377 = scmp.lt.s32.totalorder %s35, 0
      %s378 = scalar_select %p377, %s35, 0
      %s379 = scalar_lea.vmem %s9, %s378
      %p380 = scmp.lt.s32.totalorder %s35, 0
      %s381 = scalar_select %p380, %s35, 0
      %s382 = smul.addr %s381, 8
      %s383 = scalar_lea.vmem %s10, %s382
      %p384 = scmp.eq.s32.totalorder %s34, 0
      %p385 = scmp.eq.s32.totalorder %s35, 0
      %p386 = pnand %p384, %p385
      %p387 = pneg %p386
      // Predicated region
      $region53: #{attention_decoder_v2.1} parent=51 // pred_check
        _
      $region54: #{attention_decoder_v2.1} parent=51 // pred_check_branch
        %389 = sbr.rel (%p386) target = $region56
      $region55: #{attention_decoder_v2.1} parent=51 // pred_region
        %s390 = sld [smem:[#allocation8]]
        %s391 = scalar_lea.vmem %s1, %s390
        %p393 = scmp.lt.u32.totalorder 1, 8
        %p394 = pneg %p393
        // Predicated region
        $region57: #{attention_decoder_v2.1} parent=55 // pred_check
          _
        $region58: #{attention_decoder_v2.1} parent=55 // pred_check_branch
          %396 = sbr.rel (%p393) target = $region60
        $region59: #{attention_decoder_v2.1} parent=55 // pred_region
          %s412 = sand.u32 1, 7
          %p413 = scmp.eq.s32.totalorder %s412, 0
          %p414 = pneg %p413
          // Predicated region
          $region72: #{attention_decoder_v2.1} parent=59 // pred_check
            _
          $region73: #{attention_decoder_v2.1} parent=59 // pred_check_branch
            %416 = sbr.rel (%p413) target = $region75
          $region74: #{attention_decoder_v2.1} parent=59 // pred_region
            %s417 = sand.u32 1, 7
            %s418 = ssub.s32 1, %s417
            %s419 = scalar_lea.vmem %s391, %s418
            %s420 = ssub.s32 1, %s417
            %s421 = scalar_lea.vmem [#allocation2], %s420
            %s422 = sshll.u32 1, %s417
            %s423 = ssub.s32 %s422, 1
            loop: start=0, step=1, limit=1
            $region76: #{attention_decoder_v2.1} parent=74 // loop_pre_header
              _
            $region77: #{attention_decoder_v2.1} parent=74 // loop_header
              %s425 = sphi 0, %s429
              %p426 = scmp.ge.s32.totalorder %s425, 1
              %s430 = sphi %s419, %s419
              %s431 = sphi %s421, %s421
            $region78: #{attention_decoder_v2.1} parent=74 // loop_header_branch
              %428 = sbr.rel (%p426) target = $region82
            $region79: #{attention_decoder_v2.1} parent=74 // loop_body
              %v432 = vld [vmem:[%s430] sm:%s423]
              %433 = vst [vmem:[%s431] sm:%s423] %v432
            $region80: #{attention_decoder_v2.1} parent=74 // loop_footer
              %s429 = sadd.s32 1, %s425
            $region81: #{attention_decoder_v2.1} parent=74 // loop_footer_branch
              %424 = sbr.rel target = $region77
            $region82: #{attention_decoder_v2.1} parent=74 // loop_exit
              _
          $region75: #{attention_decoder_v2.1} parent=59 // pred_fallthru
            _
        $region60: #{attention_decoder_v2.1} parent=55 // pred_fallthru
          _
        // Predicated region
        $region61: #{attention_decoder_v2.1} parent=55 // pred_check
          %p397 = pneg %p393
        $region62: #{attention_decoder_v2.1} parent=55 // pred_check_branch
          %399 = sbr.rel (%p397) target = $region64
        $region63: #{attention_decoder_v2.1} parent=55 // pred_region
          %s400 = sshll.u32 1, 1
          %s401 = ssub.s32 %s400, 1
          loop: start=0, step=1, limit=1
          $region65: #{attention_decoder_v2.1} parent=63 // loop_pre_header
            _
          $region66: #{attention_decoder_v2.1} parent=63 // loop_header
            %s403 = sphi 0, %s407
            %p404 = scmp.ge.s32.totalorder %s403, 1
            %s408 = sphi %s391, %s391
            %s409 = sphi [#allocation2], [#allocation2]
          $region67: #{attention_decoder_v2.1} parent=63 // loop_header_branch
            %406 = sbr.rel (%p404) target = $region71
          $region68: #{attention_decoder_v2.1} parent=63 // loop_body
            %v410 = vld [vmem:[%s408] sm:%s401]
            %411 = vst [vmem:[%s409] sm:%s401] %v410
          $region69: #{attention_decoder_v2.1} parent=63 // loop_footer
            %s407 = sadd.s32 1, %s403
          $region70: #{attention_decoder_v2.1} parent=63 // loop_footer_branch
            %402 = sbr.rel target = $region66
          $region71: #{attention_decoder_v2.1} parent=63 // loop_exit
            _
        $region64: #{attention_decoder_v2.1} parent=55 // pred_fallthru
          _
        // Predicated region
        $region83: #{attention_decoder_v2.1} parent=55 // pred_check
          _
        $region84: #{attention_decoder_v2.1} parent=55 // pred_check_branch
          %436 = sbr.rel (0) target = $region86
        $region85: #{attention_decoder_v2.1} parent=55 // pred_region
          %437 = vsyncadd [#allocation6], 16
        $region86: #{attention_decoder_v2.1} parent=55 // pred_fallthru
          _
        %s438 = sld [smem:[#allocation8 + $0x1]]
        %s439 = scalar_lea.vmem %s1, %s438
        %s440 = scalar_lea.vmem [#allocation2], 1
        %s441 = scalar_lea.sflag [#allocation6], 1
        %p443 = scmp.lt.u32.totalorder 1, 8
        %p444 = pneg %p443
        // Predicated region
        $region87: #{attention_decoder_v2.1} parent=55 // pred_check
          _
        $region88: #{attention_decoder_v2.1} parent=55 // pred_check_branch
          %446 = sbr.rel (%p443) target = $region90
        $region89: #{attention_decoder_v2.1} parent=55 // pred_region
          %s462 = sand.u32 1, 7
          %p463 = scmp.eq.s32.totalorder %s462, 0
          %p464 = pneg %p463
          // Predicated region
          $region102: #{attention_decoder_v2.1} parent=89 // pred_check
            _
          $region103: #{attention_decoder_v2.1} parent=89 // pred_check_branch
            %466 = sbr.rel (%p463) target = $region105
          $region104: #{attention_decoder_v2.1} parent=89 // pred_region
            %s467 = sand.u32 1, 7
            %s468 = ssub.s32 1, %s467
            %s469 = scalar_lea.vmem %s439, %s468
            %s470 = ssub.s32 1, %s467
            %s471 = scalar_lea.vmem %s440, %s470 [#allocation2]
            %s472 = sshll.u32 1, %s467
            %s473 = ssub.s32 %s472, 1
            loop: start=0, step=1, limit=1
            $region106: #{attention_decoder_v2.1} parent=104 // loop_pre_header
              _
            $region107: #{attention_decoder_v2.1} parent=104 // loop_header
              %s475 = sphi 0, %s479
              %p476 = scmp.ge.s32.totalorder %s475, 1
              %s480 = sphi %s469, %s469
              %s481 = sphi %s471, %s471
            $region108: #{attention_decoder_v2.1} parent=104 // loop_header_branch
              %478 = sbr.rel (%p476) target = $region112
            $region109: #{attention_decoder_v2.1} parent=104 // loop_body
              %v482 = vld [vmem:[%s480] sm:%s473]
              %483 = vst [vmem:[%s481] sm:%s473] %v482
            $region110: #{attention_decoder_v2.1} parent=104 // loop_footer
              %s479 = sadd.s32 1, %s475
            $region111: #{attention_decoder_v2.1} parent=104 // loop_footer_branch
              %474 = sbr.rel target = $region107
            $region112: #{attention_decoder_v2.1} parent=104 // loop_exit
              _
          $region105: #{attention_decoder_v2.1} parent=89 // pred_fallthru
            _
        $region90: #{attention_decoder_v2.1} parent=55 // pred_fallthru
          _
        // Predicated region
        $region91: #{attention_decoder_v2.1} parent=55 // pred_check
          %p447 = pneg %p443
        $region92: #{attention_decoder_v2.1} parent=55 // pred_check_branch
          %449 = sbr.rel (%p447) target = $region94
        $region93: #{attention_decoder_v2.1} parent=55 // pred_region
          %s450 = sshll.u32 1, 1
          %s451 = ssub.s32 %s450, 1
          loop: start=0, step=1, limit=1
          $region95: #{attention_decoder_v2.1} parent=93 // loop_pre_header
            _
          $region96: #{attention_decoder_v2.1} parent=93 // loop_header
            %s453 = sphi 0, %s457
            %p454 = scmp.ge.s32.totalorder %s453, 1
            %s458 = sphi %s439, %s439
            %s459 = sphi %s440, %s440
          $region97: #{attention_decoder_v2.1} parent=93 // loop_header_branch
            %456 = sbr.rel (%p454) target = $region101
          $region98: #{attention_decoder_v2.1} parent=93 // loop_body
            %v460 = vld [vmem:[%s458] sm:%s451]
            %461 = vst [vmem:[%s459] sm:%s451] %v460
          $region99: #{attention_decoder_v2.1} parent=93 // loop_footer
            %s457 = sadd.s32 1, %s453
          $region100: #{attention_decoder_v2.1} parent=93 // loop_footer_branch
            %452 = sbr.rel target = $region96
          $region101: #{attention_decoder_v2.1} parent=93 // loop_exit
            _
        $region94: #{attention_decoder_v2.1} parent=55 // pred_fallthru
          _
        // Predicated region
        $region113: #{attention_decoder_v2.1} parent=55 // pred_check
          _
        $region114: #{attention_decoder_v2.1} parent=55 // pred_check_branch
          %486 = sbr.rel (0) target = $region116
        $region115: #{attention_decoder_v2.1} parent=55 // pred_region
          %487 = vsyncadd %s441, 16
        $region116: #{attention_decoder_v2.1} parent=55 // pred_fallthru
          _
        %s488 = sld [smem:[#allocation8 + $0x2]]
        %s489 = scalar_lea.vmem %s1, %s488
        %s490 = scalar_lea.vmem [#allocation2], 2
        %s491 = scalar_lea.sflag [#allocation6], 2
        %p493 = scmp.lt.u32.totalorder 1, 8
        %p494 = pneg %p493
        // Predicated region
        $region117: #{attention_decoder_v2.1} parent=55 // pred_check
          _
        $region118: #{attention_decoder_v2.1} parent=55 // pred_check_branch
          %496 = sbr.rel (%p493) target = $region120
        $region119: #{attention_decoder_v2.1} parent=55 // pred_region
          %s512 = sand.u32 1, 7
          %p513 = scmp.eq.s32.totalorder %s512, 0
          %p514 = pneg %p513
          // Predicated region
          $region132: #{attention_decoder_v2.1} parent=119 // pred_check
            _
          $region133: #{attention_decoder_v2.1} parent=119 // pred_check_branch
            %516 = sbr.rel (%p513) target = $region135
          $region134: #{attention_decoder_v2.1} parent=119 // pred_region
            %s517 = sand.u32 1, 7
            %s518 = ssub.s32 1, %s517
            %s519 = scalar_lea.vmem %s489, %s518
            %s520 = ssub.s32 1, %s517
            %s521 = scalar_lea.vmem %s490, %s520 [#allocation2]
            %s522 = sshll.u32 1, %s517
            %s523 = ssub.s32 %s522, 1
            loop: start=0, step=1, limit=1
            $region136: #{attention_decoder_v2.1} parent=134 // loop_pre_header
              _
            $region137: #{attention_decoder_v2.1} parent=134 // loop_header
              %s525 = sphi 0, %s529
              %p526 = scmp.ge.s32.totalorder %s525, 1
              %s530 = sphi %s519, %s519
              %s531 = sphi %s521, %s521
            $region138: #{attention_decoder_v2.1} parent=134 // loop_header_branch
              %528 = sbr.rel (%p526) target = $region142
            $region139: #{attention_decoder_v2.1} parent=134 // loop_body
              %v532 = vld [vmem:[%s530] sm:%s523]
              %533 = vst [vmem:[%s531] sm:%s523] %v532
            $region140: #{attention_decoder_v2.1} parent=134 // loop_footer
              %s529 = sadd.s32 1, %s525
            $region141: #{attention_decoder_v2.1} parent=134 // loop_footer_branch
              %524 = sbr.rel target = $region137
            $region142: #{attention_decoder_v2.1} parent=134 // loop_exit
              _
          $region135: #{attention_decoder_v2.1} parent=119 // pred_fallthru
            _
        $region120: #{attention_decoder_v2.1} parent=55 // pred_fallthru
          _
        // Predicated region
        $region121: #{attention_decoder_v2.1} parent=55 // pred_check
          %p497 = pneg %p493
        $region122: #{attention_decoder_v2.1} parent=55 // pred_check_branch
          %499 = sbr.rel (%p497) target = $region124
        $region123: #{attention_decoder_v2.1} parent=55 // pred_region
          %s500 = sshll.u32 1, 1
          %s501 = ssub.s32 %s500, 1
          loop: start=0, step=1, limit=1
          $region125: #{attention_decoder_v2.1} parent=123 // loop_pre_header
            _
          $region126: #{attention_decoder_v2.1} parent=123 // loop_header
            %s503 = sphi 0, %s507
            %p504 = scmp.ge.s32.totalorder %s503, 1
            %s508 = sphi %s489, %s489
            %s509 = sphi %s490, %s490
          $region127: #{attention_decoder_v2.1} parent=123 // loop_header_branch
            %506 = sbr.rel (%p504) target = $region131
          $region128: #{attention_decoder_v2.1} parent=123 // loop_body
            %v510 = vld [vmem:[%s508] sm:%s501]
            %511 = vst [vmem:[%s509] sm:%s501] %v510
          $region129: #{attention_decoder_v2.1} parent=123 // loop_footer
            %s507 = sadd.s32 1, %s503
          $region130: #{attention_decoder_v2.1} parent=123 // loop_footer_branch
            %502 = sbr.rel target = $region126
          $region131: #{attention_decoder_v2.1} parent=123 // loop_exit
            _
        $region124: #{attention_decoder_v2.1} parent=55 // pred_fallthru
          _
        // Predicated region
        $region143: #{attention_decoder_v2.1} parent=55 // pred_check
          _
        $region144: #{attention_decoder_v2.1} parent=55 // pred_check_branch
          %536 = sbr.rel (0) target = $region146
        $region145: #{attention_decoder_v2.1} parent=55 // pred_region
          %537 = vsyncadd %s491, 16
        $region146: #{attention_decoder_v2.1} parent=55 // pred_fallthru
          _
        %s538 = sld [smem:[#allocation8 + $0x3]]
        %s539 = scalar_lea.vmem %s1, %s538
        %s540 = scalar_lea.vmem [#allocation2], 3
        %s541 = scalar_lea.sflag [#allocation6], 3
        %p543 = scmp.lt.u32.totalorder 1, 8
        %p544 = pneg %p543
        // Predicated region
        $region147: #{attention_decoder_v2.1} parent=55 // pred_check
          _
        $region148: #{attention_decoder_v2.1} parent=55 // pred_check_branch
          %546 = sbr.rel (%p543) target = $region150
        $region149: #{attention_decoder_v2.1} parent=55 // pred_region
          %s562 = sand.u32 1, 7
          %p563 = scmp.eq.s32.totalorder %s562, 0
          %p564 = pneg %p563
          // Predicated region
          $region162: #{attention_decoder_v2.1} parent=149 // pred_check
            _
          $region163: #{attention_decoder_v2.1} parent=149 // pred_check_branch
            %566 = sbr.rel (%p563) target = $region165
          $region164: #{attention_decoder_v2.1} parent=149 // pred_region
            %s567 = sand.u32 1, 7
            %s568 = ssub.s32 1, %s567
            %s569 = scalar_lea.vmem %s539, %s568
            %s570 = ssub.s32 1, %s567
            %s571 = scalar_lea.vmem %s540, %s570 [#allocation2]
            %s572 = sshll.u32 1, %s567
            %s573 = ssub.s32 %s572, 1
            loop: start=0, step=1, limit=1
            $region166: #{attention_decoder_v2.1} parent=164 // loop_pre_header
              _
            $region167: #{attention_decoder_v2.1} parent=164 // loop_header
              %s575 = sphi 0, %s579
              %p576 = scmp.ge.s32.totalorder %s575, 1
              %s580 = sphi %s569, %s569
              %s581 = sphi %s571, %s571
            $region168: #{attention_decoder_v2.1} parent=164 // loop_header_branch
              %578 = sbr.rel (%p576) target = $region172
            $region169: #{attention_decoder_v2.1} parent=164 // loop_body
              %v582 = vld [vmem:[%s580] sm:%s573]
              %583 = vst [vmem:[%s581] sm:%s573] %v582
            $region170: #{attention_decoder_v2.1} parent=164 // loop_footer
              %s579 = sadd.s32 1, %s575
            $region171: #{attention_decoder_v2.1} parent=164 // loop_footer_branch
              %574 = sbr.rel target = $region167
            $region172: #{attention_decoder_v2.1} parent=164 // loop_exit
              _
          $region165: #{attention_decoder_v2.1} parent=149 // pred_fallthru
            _
        $region150: #{attention_decoder_v2.1} parent=55 // pred_fallthru
          _
        // Predicated region
        $region151: #{attention_decoder_v2.1} parent=55 // pred_check
          %p547 = pneg %p543
        $region152: #{attention_decoder_v2.1} parent=55 // pred_check_branch
          %549 = sbr.rel (%p547) target = $region154
        $region153: #{attention_decoder_v2.1} parent=55 // pred_region
          %s550 = sshll.u32 1, 1
          %s551 = ssub.s32 %s550, 1
          loop: start=0, step=1, limit=1
          $region155: #{attention_decoder_v2.1} parent=153 // loop_pre_header
            _
          $region156: #{attention_decoder_v2.1} parent=153 // loop_header
            %s553 = sphi 0, %s557
            %p554 = scmp.ge.s32.totalorder %s553, 1
            %s558 = sphi %s539, %s539
            %s559 = sphi %s540, %s540
          $region157: #{attention_decoder_v2.1} parent=153 // loop_header_branch
            %556 = sbr.rel (%p554) target = $region161
          $region158: #{attention_decoder_v2.1} parent=153 // loop_body
            %v560 = vld [vmem:[%s558] sm:%s551]
            %561 = vst [vmem:[%s559] sm:%s551] %v560
          $region159: #{attention_decoder_v2.1} parent=153 // loop_footer
            %s557 = sadd.s32 1, %s553
          $region160: #{attention_decoder_v2.1} parent=153 // loop_footer_branch
            %552 = sbr.rel target = $region156
          $region161: #{attention_decoder_v2.1} parent=153 // loop_exit
            _
        $region154: #{attention_decoder_v2.1} parent=55 // pred_fallthru
          _
        // Predicated region
        $region173: #{attention_decoder_v2.1} parent=55 // pred_check
          _
        $region174: #{attention_decoder_v2.1} parent=55 // pred_check_branch
          %586 = sbr.rel (0) target = $region176
        $region175: #{attention_decoder_v2.1} parent=55 // pred_region
          %587 = vsyncadd %s541, 16
        $region176: #{attention_decoder_v2.1} parent=55 // pred_fallthru
          _
        %s588 = sld [smem:[#allocation8 + $0x4]]
        %s589 = scalar_lea.vmem %s1, %s588
        %s590 = scalar_lea.vmem [#allocation2], 4
        %s591 = scalar_lea.sflag [#allocation6], 4
        %p593 = scmp.lt.u32.totalorder 1, 8
        %p594 = pneg %p593
        // Predicated region
        $region177: #{attention_decoder_v2.1} parent=55 // pred_check
          _
        $region178: #{attention_decoder_v2.1} parent=55 // pred_check_branch
          %596 = sbr.rel (%p593) target = $region180
        $region179: #{attention_decoder_v2.1} parent=55 // pred_region
          %s612 = sand.u32 1, 7
          %p613 = scmp.eq.s32.totalorder %s612, 0
          %p614 = pneg %p613
          // Predicated region
          $region192: #{attention_decoder_v2.1} parent=179 // pred_check
            _
          $region193: #{attention_decoder_v2.1} parent=179 // pred_check_branch
            %616 = sbr.rel (%p613) target = $region195
          $region194: #{attention_decoder_v2.1} parent=179 // pred_region
            %s617 = sand.u32 1, 7
            %s618 = ssub.s32 1, %s617
            %s619 = scalar_lea.vmem %s589, %s618
            %s620 = ssub.s32 1, %s617
            %s621 = scalar_lea.vmem %s590, %s620 [#allocation2]
            %s622 = sshll.u32 1, %s617
            %s623 = ssub.s32 %s622, 1
            loop: start=0, step=1, limit=1
            $region196: #{attention_decoder_v2.1} parent=194 // loop_pre_header
              _
            $region197: #{attention_decoder_v2.1} parent=194 // loop_header
              %s625 = sphi 0, %s629
              %p626 = scmp.ge.s32.totalorder %s625, 1
              %s630 = sphi %s619, %s619
              %s631 = sphi %s621, %s621
            $region198: #{attention_decoder_v2.1} parent=194 // loop_header_branch
              %628 = sbr.rel (%p626) target = $region202
            $region199: #{attention_decoder_v2.1} parent=194 // loop_body
              %v632 = vld [vmem:[%s630] sm:%s623]
              %633 = vst [vmem:[%s631] sm:%s623] %v632
            $region200: #{attention_decoder_v2.1} parent=194 // loop_footer
              %s629 = sadd.s32 1, %s625
            $region201: #{attention_decoder_v2.1} parent=194 // loop_footer_branch
              %624 = sbr.rel target = $region197
            $region202: #{attention_decoder_v2.1} parent=194 // loop_exit
              _
          $region195: #{attention_decoder_v2.1} parent=179 // pred_fallthru
            _
        $region180: #{attention_decoder_v2.1} parent=55 // pred_fallthru
          _
        // Predicated region
        $region181: #{attention_decoder_v2.1} parent=55 // pred_check
          %p597 = pneg %p593
        $region182: #{attention_decoder_v2.1} parent=55 // pred_check_branch
          %599 = sbr.rel (%p597) target = $region184
        $region183: #{attention_decoder_v2.1} parent=55 // pred_region
          %s600 = sshll.u32 1, 1
          %s601 = ssub.s32 %s600, 1
          loop: start=0, step=1, limit=1
          $region185: #{attention_decoder_v2.1} parent=183 // loop_pre_header
            _
          $region186: #{attention_decoder_v2.1} parent=183 // loop_header
            %s603 = sphi 0, %s607
            %p604 = scmp.ge.s32.totalorder %s603, 1
            %s608 = sphi %s589, %s589
            %s609 = sphi %s590, %s590
          $region187: #{attention_decoder_v2.1} parent=183 // loop_header_branch
            %606 = sbr.rel (%p604) target = $region191
          $region188: #{attention_decoder_v2.1} parent=183 // loop_body
            %v610 = vld [vmem:[%s608] sm:%s601]
            %611 = vst [vmem:[%s609] sm:%s601] %v610
          $region189: #{attention_decoder_v2.1} parent=183 // loop_footer
            %s607 = sadd.s32 1, %s603
          $region190: #{attention_decoder_v2.1} parent=183 // loop_footer_branch
            %602 = sbr.rel target = $region186
          $region191: #{attention_decoder_v2.1} parent=183 // loop_exit
            _
        $region184: #{attention_decoder_v2.1} parent=55 // pred_fallthru
          _
        // Predicated region
        $region203: #{attention_decoder_v2.1} parent=55 // pred_check
          _
        $region204: #{attention_decoder_v2.1} parent=55 // pred_check_branch
          %636 = sbr.rel (0) target = $region206
        $region205: #{attention_decoder_v2.1} parent=55 // pred_region
          %637 = vsyncadd %s591, 16
        $region206: #{attention_decoder_v2.1} parent=55 // pred_fallthru
          _
        %s638 = sld [smem:[#allocation8 + $0x5]]
        %s639 = scalar_lea.vmem %s1, %s638
        %s640 = scalar_lea.vmem [#allocation2], 5
        %s641 = scalar_lea.sflag [#allocation6], 5
        %p643 = scmp.lt.u32.totalorder 1, 8
        %p644 = pneg %p643
        // Predicated region
        $region207: #{attention_decoder_v2.1} parent=55 // pred_check
          _
        $region208: #{attention_decoder_v2.1} parent=55 // pred_check_branch
          %646 = sbr.rel (%p643) target = $region210
        $region209: #{attention_decoder_v2.1} parent=55 // pred_region
          %s662 = sand.u32 1, 7
          %p663 = scmp.eq.s32.totalorder %s662, 0
          %p664 = pneg %p663
          // Predicated region
          $region222: #{attention_decoder_v2.1} parent=209 // pred_check
            _
          $region223: #{attention_decoder_v2.1} parent=209 // pred_check_branch
            %666 = sbr.rel (%p663) target = $region225
          $region224: #{attention_decoder_v2.1} parent=209 // pred_region
            %s667 = sand.u32 1, 7
            %s668 = ssub.s32 1, %s667
            %s669 = scalar_lea.vmem %s639, %s668
            %s670 = ssub.s32 1, %s667
            %s671 = scalar_lea.vmem %s640, %s670 [#allocation2]
            %s672 = sshll.u32 1, %s667
            %s673 = ssub.s32 %s672, 1
            loop: start=0, step=1, limit=1
            $region226: #{attention_decoder_v2.1} parent=224 // loop_pre_header
              _
            $region227: #{attention_decoder_v2.1} parent=224 // loop_header
              %s675 = sphi 0, %s679
              %p676 = scmp.ge.s32.totalorder %s675, 1
              %s680 = sphi %s669, %s669
              %s681 = sphi %s671, %s671
            $region228: #{attention_decoder_v2.1} parent=224 // loop_header_branch
              %678 = sbr.rel (%p676) target = $region232
            $region229: #{attention_decoder_v2.1} parent=224 // loop_body
              %v682 = vld [vmem:[%s680] sm:%s673]
              %683 = vst [vmem:[%s681] sm:%s673] %v682
            $region230: #{attention_decoder_v2.1} parent=224 // loop_footer
              %s679 = sadd.s32 1, %s675
            $region231: #{attention_decoder_v2.1} parent=224 // loop_footer_branch
              %674 = sbr.rel target = $region227
            $region232: #{attention_decoder_v2.1} parent=224 // loop_exit
              _
          $region225: #{attention_decoder_v2.1} parent=209 // pred_fallthru
            _
        $region210: #{attention_decoder_v2.1} parent=55 // pred_fallthru
          _
        // Predicated region
        $region211: #{attention_decoder_v2.1} parent=55 // pred_check
          %p647 = pneg %p643
        $region212: #{attention_decoder_v2.1} parent=55 // pred_check_branch
          %649 = sbr.rel (%p647) target = $region214
        $region213: #{attention_decoder_v2.1} parent=55 // pred_region
          %s650 = sshll.u32 1, 1
          %s651 = ssub.s32 %s650, 1
          loop: start=0, step=1, limit=1
          $region215: #{attention_decoder_v2.1} parent=213 // loop_pre_header
            _
          $region216: #{attention_decoder_v2.1} parent=213 // loop_header
            %s653 = sphi 0, %s657
            %p654 = scmp.ge.s32.totalorder %s653, 1
            %s658 = sphi %s639, %s639
            %s659 = sphi %s640, %s640
          $region217: #{attention_decoder_v2.1} parent=213 // loop_header_branch
            %656 = sbr.rel (%p654) target = $region221
          $region218: #{attention_decoder_v2.1} parent=213 // loop_body
            %v660 = vld [vmem:[%s658] sm:%s651]
            %661 = vst [vmem:[%s659] sm:%s651] %v660
          $region219: #{attention_decoder_v2.1} parent=213 // loop_footer
            %s657 = sadd.s32 1, %s653
          $region220: #{attention_decoder_v2.1} parent=213 // loop_footer_branch
            %652 = sbr.rel target = $region216
          $region221: #{attention_decoder_v2.1} parent=213 // loop_exit
            _
        $region214: #{attention_decoder_v2.1} parent=55 // pred_fallthru
          _
        // Predicated region
        $region233: #{attention_decoder_v2.1} parent=55 // pred_check
          _
        $region234: #{attention_decoder_v2.1} parent=55 // pred_check_branch
          %686 = sbr.rel (0) target = $region236
        $region235: #{attention_decoder_v2.1} parent=55 // pred_region
          %687 = vsyncadd %s641, 16
        $region236: #{attention_decoder_v2.1} parent=55 // pred_fallthru
          _
        %s688 = sld [smem:[#allocation8 + $0x6]]
        %s689 = scalar_lea.vmem %s1, %s688
        %s690 = scalar_lea.vmem [#allocation2], 6
        %s691 = scalar_lea.sflag [#allocation6], 6
        %p693 = scmp.lt.u32.totalorder 1, 8
        %p694 = pneg %p693
        // Predicated region
        $region237: #{attention_decoder_v2.1} parent=55 // pred_check
          _
        $region238: #{attention_decoder_v2.1} parent=55 // pred_check_branch
          %696 = sbr.rel (%p693) target = $region240
        $region239: #{attention_decoder_v2.1} parent=55 // pred_region
          %s712 = sand.u32 1, 7
          %p713 = scmp.eq.s32.totalorder %s712, 0
          %p714 = pneg %p713
          // Predicated region
          $region252: #{attention_decoder_v2.1} parent=239 // pred_check
            _
          $region253: #{attention_decoder_v2.1} parent=239 // pred_check_branch
            %716 = sbr.rel (%p713) target = $region255
          $region254: #{attention_decoder_v2.1} parent=239 // pred_region
            %s717 = sand.u32 1, 7
            %s718 = ssub.s32 1, %s717
            %s719 = scalar_lea.vmem %s689, %s718
            %s720 = ssub.s32 1, %s717
            %s721 = scalar_lea.vmem %s690, %s720 [#allocation2]
            %s722 = sshll.u32 1, %s717
            %s723 = ssub.s32 %s722, 1
            loop: start=0, step=1, limit=1
            $region256: #{attention_decoder_v2.1} parent=254 // loop_pre_header
              _
            $region257: #{attention_decoder_v2.1} parent=254 // loop_header
              %s725 = sphi 0, %s729
              %p726 = scmp.ge.s32.totalorder %s725, 1
              %s730 = sphi %s719, %s719
              %s731 = sphi %s721, %s721
            $region258: #{attention_decoder_v2.1} parent=254 // loop_header_branch
              %728 = sbr.rel (%p726) target = $region262
            $region259: #{attention_decoder_v2.1} parent=254 // loop_body
              %v732 = vld [vmem:[%s730] sm:%s723]
              %733 = vst [vmem:[%s731] sm:%s723] %v732
            $region260: #{attention_decoder_v2.1} parent=254 // loop_footer
              %s729 = sadd.s32 1, %s725
            $region261: #{attention_decoder_v2.1} parent=254 // loop_footer_branch
              %724 = sbr.rel target = $region257
            $region262: #{attention_decoder_v2.1} parent=254 // loop_exit
              _
          $region255: #{attention_decoder_v2.1} parent=239 // pred_fallthru
            _
        $region240: #{attention_decoder_v2.1} parent=55 // pred_fallthru
          _
        // Predicated region
        $region241: #{attention_decoder_v2.1} parent=55 // pred_check
          %p697 = pneg %p693
        $region242: #{attention_decoder_v2.1} parent=55 // pred_check_branch
          %699 = sbr.rel (%p697) target = $region244
        $region243: #{attention_decoder_v2.1} parent=55 // pred_region
          %s700 = sshll.u32 1, 1
          %s701 = ssub.s32 %s700, 1
          loop: start=0, step=1, limit=1
          $region245: #{attention_decoder_v2.1} parent=243 // loop_pre_header
            _
          $region246: #{attention_decoder_v2.1} parent=243 // loop_header
            %s703 = sphi 0, %s707
            %p704 = scmp.ge.s32.totalorder %s703, 1
            %s708 = sphi %s689, %s689
            %s709 = sphi %s690, %s690
          $region247: #{attention_decoder_v2.1} parent=243 // loop_header_branch
            %706 = sbr.rel (%p704) target = $region251
          $region248: #{attention_decoder_v2.1} parent=243 // loop_body
            %v710 = vld [vmem:[%s708] sm:%s701]
            %711 = vst [vmem:[%s709] sm:%s701] %v710
          $region249: #{attention_decoder_v2.1} parent=243 // loop_footer
            %s707 = sadd.s32 1, %s703
          $region250: #{attention_decoder_v2.1} parent=243 // loop_footer_branch
            %702 = sbr.rel target = $region246
          $region251: #{attention_decoder_v2.1} parent=243 // loop_exit
            _
        $region244: #{attention_decoder_v2.1} parent=55 // pred_fallthru
          _
        // Predicated region
        $region263: #{attention_decoder_v2.1} parent=55 // pred_check
          _
        $region264: #{attention_decoder_v2.1} parent=55 // pred_check_branch
          %736 = sbr.rel (0) target = $region266
        $region265: #{attention_decoder_v2.1} parent=55 // pred_region
          %737 = vsyncadd %s691, 16
        $region266: #{attention_decoder_v2.1} parent=55 // pred_fallthru
          _
        %s738 = sld [smem:[#allocation8 + $0x7]]
        %s739 = scalar_lea.vmem %s1, %s738
        %s740 = scalar_lea.vmem [#allocation2], 7
        %s741 = scalar_lea.sflag [#allocation6], 7
        %p743 = scmp.lt.u32.totalorder 1, 8
        %p744 = pneg %p743
        // Predicated region
        $region267: #{attention_decoder_v2.1} parent=55 // pred_check
          _
        $region268: #{attention_decoder_v2.1} parent=55 // pred_check_branch
          %746 = sbr.rel (%p743) target = $region270
        $region269: #{attention_decoder_v2.1} parent=55 // pred_region
          %s762 = sand.u32 1, 7
          %p763 = scmp.eq.s32.totalorder %s762, 0
          %p764 = pneg %p763
          // Predicated region
          $region282: #{attention_decoder_v2.1} parent=269 // pred_check
            _
          $region283: #{attention_decoder_v2.1} parent=269 // pred_check_branch
            %766 = sbr.rel (%p763) target = $region285
          $region284: #{attention_decoder_v2.1} parent=269 // pred_region
            %s767 = sand.u32 1, 7
            %s768 = ssub.s32 1, %s767
            %s769 = scalar_lea.vmem %s739, %s768
            %s770 = ssub.s32 1, %s767
            %s771 = scalar_lea.vmem %s740, %s770 [#allocation2]
            %s772 = sshll.u32 1, %s767
            %s773 = ssub.s32 %s772, 1
            loop: start=0, step=1, limit=1
            $region286: #{attention_decoder_v2.1} parent=284 // loop_pre_header
              _
            $region287: #{attention_decoder_v2.1} parent=284 // loop_header
              %s775 = sphi 0, %s779
              %p776 = scmp.ge.s32.totalorder %s775, 1
              %s780 = sphi %s769, %s769
              %s781 = sphi %s771, %s771
            $region288: #{attention_decoder_v2.1} parent=284 // loop_header_branch
              %778 = sbr.rel (%p776) target = $region292
            $region289: #{attention_decoder_v2.1} parent=284 // loop_body
              %v782 = vld [vmem:[%s780] sm:%s773]
              %783 = vst [vmem:[%s781] sm:%s773] %v782
            $region290: #{attention_decoder_v2.1} parent=284 // loop_footer
              %s779 = sadd.s32 1, %s775
            $region291: #{attention_decoder_v2.1} parent=284 // loop_footer_branch
              %774 = sbr.rel target = $region287
            $region292: #{attention_decoder_v2.1} parent=284 // loop_exit
              _
          $region285: #{attention_decoder_v2.1} parent=269 // pred_fallthru
            _
        $region270: #{attention_decoder_v2.1} parent=55 // pred_fallthru
          _
        // Predicated region
        $region271: #{attention_decoder_v2.1} parent=55 // pred_check
          %p747 = pneg %p743
        $region272: #{attention_decoder_v2.1} parent=55 // pred_check_branch
          %749 = sbr.rel (%p747) target = $region274
        $region273: #{attention_decoder_v2.1} parent=55 // pred_region
          %s750 = sshll.u32 1, 1
          %s751 = ssub.s32 %s750, 1
          loop: start=0, step=1, limit=1
          $region275: #{attention_decoder_v2.1} parent=273 // loop_pre_header
            _
          $region276: #{attention_decoder_v2.1} parent=273 // loop_header
            %s753 = sphi 0, %s757
            %p754 = scmp.ge.s32.totalorder %s753, 1
            %s758 = sphi %s739, %s739
            %s759 = sphi %s740, %s740
          $region277: #{attention_decoder_v2.1} parent=273 // loop_header_branch
            %756 = sbr.rel (%p754) target = $region281
          $region278: #{attention_decoder_v2.1} parent=273 // loop_body
            %v760 = vld [vmem:[%s758] sm:%s751]
            %761 = vst [vmem:[%s759] sm:%s751] %v760
          $region279: #{attention_decoder_v2.1} parent=273 // loop_footer
            %s757 = sadd.s32 1, %s753
          $region280: #{attention_decoder_v2.1} parent=273 // loop_footer_branch
            %752 = sbr.rel target = $region276
          $region281: #{attention_decoder_v2.1} parent=273 // loop_exit
            _
        $region274: #{attention_decoder_v2.1} parent=55 // pred_fallthru
          _
        // Predicated region
        $region293: #{attention_decoder_v2.1} parent=55 // pred_check
          _
        $region294: #{attention_decoder_v2.1} parent=55 // pred_check_branch
          %786 = sbr.rel (0) target = $region296
        $region295: #{attention_decoder_v2.1} parent=55 // pred_region
          %787 = vsyncadd %s741, 16
        $region296: #{attention_decoder_v2.1} parent=55 // pred_fallthru
          _
        %s788 = sld [smem:[#allocation8]]
        %s789 = smul.u32 1, 1
        %s790 = sshll.u32 %s789, 4
        %791 = dma.done [#allocation6], %s790
        %s792 = sld [smem:[#allocation8 + $0x1]]
        %s793 = sshll.u32 %s789, 4
        %794 = dma.done %s441, %s793
        %s795 = sld [smem:[#allocation8 + $0x2]]
        %s796 = sshll.u32 %s789, 4
        %797 = dma.done %s491, %s796
        %s798 = sld [smem:[#allocation8 + $0x3]]
        %s799 = sshll.u32 %s789, 4
        %800 = dma.done %s541, %s799
        %s801 = sld [smem:[#allocation8 + $0x4]]
        %s802 = sshll.u32 %s789, 4
        %803 = dma.done %s591, %s802
        %s804 = sld [smem:[#allocation8 + $0x5]]
        %s805 = sshll.u32 %s789, 4
        %806 = dma.done %s641, %s805
        %s807 = sld [smem:[#allocation8 + $0x6]]
        %s808 = sshll.u32 %s789, 4
        %809 = dma.done %s691, %s808
        %s810 = sld [smem:[#allocation8 + $0x7]]
        %s811 = sshll.u32 %s789, 4
        %812 = dma.done %s741, %s811
        %v813 = vld [vmem:[#allocation2] sm:$0xff]
        %v814 = vld [vmem:[%s2] sm:$0xff]
        %v815 = vld [vmem:[%s3] sm:$0xff]
        %v816 = vld [vmem:[%s3 + $0x8] sm:$0xff]
        %v817 = vld [vmem:[%s3 + $0x10] sm:$0xff]
        %v818 = vld [vmem:[%s3 + $0x18] sm:$0xff]
        %v819 = vld [vmem:[%s3 + $0x20] sm:$0xff]
        %v820 = vld [vmem:[%s3 + $0x28] sm:$0xff]
        %v821 = vld [vmem:[%s3 + $0x30] sm:$0xff]
        %v822 = vld [vmem:[%s3 + $0x38] sm:$0xff]
        %v823 = vld [vmem:[%s4] sm:$0x1]
        %v825 = vcombine.high %v814, %v814
        %v827 = vunpack.c.l.s4 1966171168
        %v828 = vunpack.c.0.s8 %v827
        %v829 = vlaneseq
        %v830 = vshrl.u32 %v829, 7
        %v831 = vsub.s32 %v828, %v830
        %v832 = vrot.slane %v814, %v831
        %v834 = vunpack.c.l.s4 1966171168
        %v835 = vunpack.c.0.s8 %v834
        %v836 = vlaneseq
        %v837 = vshrl.u32 %v836, 7
        %v838 = vsub.s32 %v835, %v837
        %v839 = vrot.slane %v825, %v838
        %v840 = vcombine.high %v832, %v832
        %v841 = vcombine.high %v839, %v839
        %v843 = vunpack.c.l.s4 1966171168
        %v844 = vunpack.c.0.s8 %v843
        %v845 = vlaneseq
        %v846 = vshrl.u32 %v845, 7
        %v847 = vsub.s32 %v844, %v846
        %v848 = vrot.slane %v832, %v847
        %v850 = vunpack.c.l.s4 1966171168
        %v851 = vunpack.c.0.s8 %v850
        %v852 = vlaneseq
        %v853 = vshrl.u32 %v852, 7
        %v854 = vsub.s32 %v851, %v853
        %v855 = vrot.slane %v839, %v854
        %v857 = vunpack.c.l.s4 1966171168
        %v858 = vunpack.c.0.s8 %v857
        %v859 = vlaneseq
        %v860 = vshrl.u32 %v859, 7
        %v861 = vsub.s32 %v858, %v860
        %v862 = vrot.slane %v840, %v861
        %v864 = vunpack.c.l.s4 1966171168
        %v865 = vunpack.c.0.s8 %v864
        %v866 = vlaneseq
        %v867 = vshrl.u32 %v866, 7
        %v868 = vsub.s32 %v865, %v867
        %v869 = vrot.slane %v841, %v868
        %v870 = vcombine.high %v848, %v848
        %v871 = vcombine.high %v855, %v855
        %v872 = vcombine.high %v862, %v862
        %v873 = vcombine.high %v869, %v869
        %v874 = vlaneseq
        %v875 = vshrl.u32 %v874, 7
        %v876 = vsub.s32 0, %v875
        %v877 = vrot.slane %v848, %v876
        %v878 = vlaneseq
        %v879 = vshrl.u32 %v878, 7
        %v880 = vsub.s32 0, %v879
        %v881 = vrot.slane %v862, %v880
        %v882 = vlaneseq
        %v883 = vshrl.u32 %v882, 7
        %v884 = vsub.s32 0, %v883
        %v885 = vrot.slane %v870, %v884
        %v886 = vlaneseq
        %v887 = vshrl.u32 %v886, 7
        %v888 = vsub.s32 0, %v887
        %v889 = vrot.slane %v872, %v888
        %v890 = vlaneseq
        %v891 = vshrl.u32 %v890, 7
        %v892 = vsub.s32 0, %v891
        %v893 = vrot.slane %v855, %v892
        %v894 = vlaneseq
        %v895 = vshrl.u32 %v894, 7
        %v896 = vsub.s32 0, %v895
        %v897 = vrot.slane %v869, %v896
        %v898 = vlaneseq
        %v899 = vshrl.u32 %v898, 7
        %v900 = vsub.s32 0, %v899
        %v901 = vrot.slane %v871, %v900
        %v902 = vlaneseq
        %v903 = vshrl.u32 %v902, 7
        %v904 = vsub.s32 0, %v903
        %v905 = vrot.slane %v873, %v904
        %v914 = vadd.f32 %v815, %v877
        %v915 = vadd.f32 %v816, %v881
        %v916 = vadd.f32 %v817, %v885
        %v917 = vadd.f32 %v818, %v889
        %v918 = vadd.f32 %v819, %v893
        %v919 = vadd.f32 %v820, %v897
        %v920 = vadd.f32 %v821, %v901
        %v921 = vadd.f32 %v822, %v905
        %v922 = vtanh.pop %v914
        %v923 = vtanh.pop %v915
        %v924 = vtanh.pop %v916
        %v925 = vtanh.pop %v917
        %v926 = vtanh.pop %v918
        %v927 = vtanh.pop %v919
        %v928 = vtanh.pop %v920
        %v929 = vtanh.pop %v921
        %v930 = vlaneseq
        %v931 = vshrl.u32 %v930, 7
        %v932 = vsub.s32 0, %v931
        %v933 = vrot.slane %v823, %v932
        %v934 = vmul.f32 %v922, %v933
        %v935 = vmul.f32 %v923, %v933
        %v936 = vmul.f32 %v924, %v933
        %v937 = vmul.f32 %v925, %v933
        %v938 = vmul.f32 %v926, %v933
        %v939 = vmul.f32 %v927, %v933
        %v940 = vmul.f32 %v928, %v933
        %v941 = vmul.f32 %v929, %v933
        %vm942 = vcmask 261120
        %v943 = vsel %vm942, %v934, 0.0
        %944 = vadd.xlane.f32.xlu0 %v943
        %v945 = vpop.xlane.xlu0 %944
        %v946 = vsel %vm942, %v935, 0.0
        %947 = vadd.xlane.f32.xlu0 %v946
        %v948 = vpop.xlane.xlu0 %947
        %v949 = vsel %vm942, %v936, 0.0
        %950 = vadd.xlane.f32.xlu0 %v949
        %v951 = vpop.xlane.xlu0 %950
        %v952 = vsel %vm942, %v937, 0.0
        %953 = vadd.xlane.f32.xlu0 %v952
        %v954 = vpop.xlane.xlu0 %953
        %v955 = vsel %vm942, %v938, 0.0
        %956 = vadd.xlane.f32.xlu0 %v955
        %v957 = vpop.xlane.xlu0 %956
        %v958 = vsel %vm942, %v939, 0.0
        %959 = vadd.xlane.f32.xlu0 %v958
        %v960 = vpop.xlane.xlu0 %959
        %v961 = vsel %vm942, %v940, 0.0
        %962 = vadd.xlane.f32.xlu0 %v961
        %v963 = vpop.xlane.xlu0 %962
        %v964 = vsel %vm942, %v941, 0.0
        %965 = vadd.xlane.f32.xlu0 %v964
        %v966 = vpop.xlane.xlu0 %965
        %v975 = vlaneseq
        %v976 = vand.u32 %v975, 127
        %v977 = vlaneseq
        %v978 = vshrl.u32 %v977, 7
        %v979 = vsub.s32 %v976, %v978
        %v980 = vrot.slane %v945, %v979
        %v981 = vlaneseq
        %v982 = vshrl.u32 %v981, 7
        %v983 = vsub.s32 %v976, %v982
        %v984 = vrot.slane %v948, %v983
        %v985 = vlaneseq
        %v986 = vshrl.u32 %v985, 7
        %v987 = vsub.s32 %v976, %v986
        %v988 = vrot.slane %v951, %v987
        %v989 = vlaneseq
        %v990 = vshrl.u32 %v989, 7
        %v991 = vsub.s32 %v976, %v990
        %v992 = vrot.slane %v954, %v991
        %v993 = vlaneseq
        %v994 = vshrl.u32 %v993, 7
        %v995 = vsub.s32 %v976, %v994
        %v996 = vrot.slane %v957, %v995
        %v997 = vlaneseq
        %v998 = vshrl.u32 %v997, 7
        %v999 = vsub.s32 %v976, %v998
        %v1000 = vrot.slane %v960, %v999
        %v1001 = vlaneseq
        %v1002 = vshrl.u32 %v1001, 7
        %v1003 = vsub.s32 %v976, %v1002
        %v1004 = vrot.slane %v963, %v1003
        %v1005 = vlaneseq
        %v1006 = vshrl.u32 %v1005, 7
        %v1007 = vsub.s32 %v976, %v1006
        %v1008 = vrot.slane %v966, %v1007
        %vm1009 = vcmask 1041409
        %v1010 = vsel %vm1009, %v984, %v980
        %vm1011 = vcmask 1042434
        %v1012 = vsel %vm1011, %v988, %v1010
        %vm1013 = vcmask 1043459
        %v1014 = vsel %vm1013, %v992, %v1012
        %vm1015 = vcmask 1044484
        %v1016 = vsel %vm1015, %v996, %v1014
        %vm1017 = vcmask 1045509
        %v1018 = vsel %vm1017, %v1000, %v1016
        %vm1019 = vcmask 1046534
        %v1020 = vsel %vm1019, %v1004, %v1018
        %vm1021 = vcmask 1047559
        %v1022 = vsel %vm1021, %v1008, %v1020
        %vm1024 = vcmask 64512
        %v1025 = vsel %vm1024, %v1022, -inf
        %1026 = vmax.xlane.f32.xlu0 %v1025
        %v1027 = vpop.xlane.xlu0 %1026
        %v1029 = vlaneseq
        %v1030 = vshrl.u32 %v1029, 7
        %v1031 = vsub.s32 0, %v1030
        %v1032 = vrot.slane %v1027, %v1031
        %v1033 = vlaneseq
        %v1034 = vshrl.u32 %v1033, 7
        %v1035 = vsub.s32 1, %v1034
        %v1036 = vrot.slane %v1027, %v1035
        %v1037 = vlaneseq
        %v1038 = vshrl.u32 %v1037, 7
        %v1039 = vsub.s32 2, %v1038
        %v1040 = vrot.slane %v1027, %v1039
        %v1041 = vlaneseq
        %v1042 = vshrl.u32 %v1041, 7
        %v1043 = vsub.s32 3, %v1042
        %v1044 = vrot.slane %v1027, %v1043
        %v1045 = vlaneseq
        %v1046 = vshrl.u32 %v1045, 7
        %v1047 = vsub.s32 4, %v1046
        %v1048 = vrot.slane %v1027, %v1047
        %v1049 = vlaneseq
        %v1050 = vshrl.u32 %v1049, 7
        %v1051 = vsub.s32 5, %v1050
        %v1052 = vrot.slane %v1027, %v1051
        %v1053 = vlaneseq
        %v1054 = vshrl.u32 %v1053, 7
        %v1055 = vsub.s32 6, %v1054
        %v1056 = vrot.slane %v1027, %v1055
        %v1057 = vlaneseq
        %v1058 = vshrl.u32 %v1057, 7
        %v1059 = vsub.s32 7, %v1058
        %v1060 = vrot.slane %v1027, %v1059
        %v1069 = vsub.f32 %v945, %v1032
        %v1070 = vsub.f32 %v948, %v1036
        %v1071 = vsub.f32 %v951, %v1040
        %v1072 = vsub.f32 %v954, %v1044
        %v1073 = vsub.f32 %v957, %v1048
        %v1074 = vsub.f32 %v960, %v1052
        %v1075 = vsub.f32 %v963, %v1056
        %v1076 = vsub.f32 %v966, %v1060
        %v1077 = vmul.f32 %v1069, 1.442695
        %v1078 = vpow.pop %v1077
        %v1079 = vmul.f32 %v1070, 1.442695
        %v1080 = vpow.pop %v1079
        %v1081 = vmul.f32 %v1071, 1.442695
        %v1082 = vpow.pop %v1081
        %v1083 = vmul.f32 %v1072, 1.442695
        %v1084 = vpow.pop %v1083
        %v1085 = vmul.f32 %v1073, 1.442695
        %v1086 = vpow.pop %v1085
        %v1087 = vmul.f32 %v1074, 1.442695
        %v1088 = vpow.pop %v1087
        %v1089 = vmul.f32 %v1075, 1.442695
        %v1090 = vpow.pop %v1089
        %v1091 = vmul.f32 %v1076, 1.442695
        %v1092 = vpow.pop %v1091
        %1101 = vset.pattern.permute.xlu0 0
        %1102 = vperm.xlu0 %1101, %v1078
        %v1103 = vpop.permute.xlu0 %1102
        %1104 = vset.pattern.permute.xlu0 0
        %1105 = vperm.xlu0 %1104, %v1080
        %v1106 = vpop.permute.xlu0 %1105
        %1107 = vset.pattern.permute.xlu0 0
        %1108 = vperm.xlu0 %1107, %v1082
        %v1109 = vpop.permute.xlu0 %1108
        %1110 = vset.pattern.permute.xlu0 0
        %1111 = vperm.xlu0 %1110, %v1084
        %v1112 = vpop.permute.xlu0 %1111
        %1113 = vset.pattern.permute.xlu0 0
        %1114 = vperm.xlu0 %1113, %v1086
        %v1115 = vpop.permute.xlu0 %1114
        %1116 = vset.pattern.permute.xlu0 0
        %1117 = vperm.xlu0 %1116, %v1088
        %v1118 = vpop.permute.xlu0 %1117
        %1119 = vset.pattern.permute.xlu0 0
        %1120 = vperm.xlu0 %1119, %v1090
        %v1121 = vpop.permute.xlu0 %1120
        %1122 = vset.pattern.permute.xlu0 0
        %1123 = vperm.xlu0 %1122, %v1092
        %v1124 = vpop.permute.xlu0 %1123
        %v1125 = vlaneseq
        %v1126 = vshrl.u32 %v1125, 7
        %v1127 = vsub.s32 %v976, %v1126
        %v1128 = vrot.slane %v1103, %v1127
        %v1129 = vlaneseq
        %v1130 = vshrl.u32 %v1129, 7
        %v1131 = vsub.s32 %v976, %v1130
        %v1132 = vrot.slane %v1106, %v1131
        %v1133 = vlaneseq
        %v1134 = vshrl.u32 %v1133, 7
        %v1135 = vsub.s32 %v976, %v1134
        %v1136 = vrot.slane %v1109, %v1135
        %v1137 = vlaneseq
        %v1138 = vshrl.u32 %v1137, 7
        %v1139 = vsub.s32 %v976, %v1138
        %v1140 = vrot.slane %v1112, %v1139
        %v1141 = vlaneseq
        %v1142 = vshrl.u32 %v1141, 7
        %v1143 = vsub.s32 %v976, %v1142
        %v1144 = vrot.slane %v1115, %v1143
        %v1145 = vlaneseq
        %v1146 = vshrl.u32 %v1145, 7
        %v1147 = vsub.s32 %v976, %v1146
        %v1148 = vrot.slane %v1118, %v1147
        %v1149 = vlaneseq
        %v1150 = vshrl.u32 %v1149, 7
        %v1151 = vsub.s32 %v976, %v1150
        %v1152 = vrot.slane %v1121, %v1151
        %v1153 = vlaneseq
        %v1154 = vshrl.u32 %v1153, 7
        %v1155 = vsub.s32 %v976, %v1154
        %v1156 = vrot.slane %v1124, %v1155
        %v1157 = vsel %vm1009, %v1132, %v1128
        %v1158 = vsel %vm1011, %v1136, %v1157
        %v1159 = vsel %vm1013, %v1140, %v1158
        %v1160 = vsel %vm1015, %v1144, %v1159
        %v1161 = vsel %vm1017, %v1148, %v1160
        %v1162 = vsel %vm1019, %v1152, %v1161
        %v1163 = vsel %vm1021, %v1156, %v1162
        %v1165 = vsel %vm1024, %v1163, 0.0
        %1166 = vadd.xlane.f32.xlu0 %v1165
        %v1167 = vpop.xlane.xlu0 %1166
        %v1169 = vlaneseq
        %v1170 = vshrl.u32 %v1169, 7
        %v1171 = vsub.s32 0, %v1170
        %v1172 = vrot.slane %v1167, %v1171
        %v1173 = vlaneseq
        %v1174 = vshrl.u32 %v1173, 7
        %v1175 = vsub.s32 1, %v1174
        %v1176 = vrot.slane %v1167, %v1175
        %v1177 = vlaneseq
        %v1178 = vshrl.u32 %v1177, 7
        %v1179 = vsub.s32 2, %v1178
        %v1180 = vrot.slane %v1167, %v1179
        %v1181 = vlaneseq
        %v1182 = vshrl.u32 %v1181, 7
        %v1183 = vsub.s32 3, %v1182
        %v1184 = vrot.slane %v1167, %v1183
        %v1185 = vlaneseq
        %v1186 = vshrl.u32 %v1185, 7
        %v1187 = vsub.s32 4, %v1186
        %v1188 = vrot.slane %v1167, %v1187
        %v1189 = vlaneseq
        %v1190 = vshrl.u32 %v1189, 7
        %v1191 = vsub.s32 5, %v1190
        %v1192 = vrot.slane %v1167, %v1191
        %v1193 = vlaneseq
        %v1194 = vshrl.u32 %v1193, 7
        %v1195 = vsub.s32 6, %v1194
        %v1196 = vrot.slane %v1167, %v1195
        %v1197 = vlaneseq
        %v1198 = vshrl.u32 %v1197, 7
        %v1199 = vsub.s32 7, %v1198
        %v1200 = vrot.slane %v1167, %v1199
        %v1209 = vrcp.pop %v1172
        %v1210 = vmul.f32 %v1078, %v1209
        %v1211 = vrcp.pop %v1176
        %v1212 = vmul.f32 %v1080, %v1211
        %v1213 = vrcp.pop %v1180
        %v1214 = vmul.f32 %v1082, %v1213
        %v1215 = vrcp.pop %v1184
        %v1216 = vmul.f32 %v1084, %v1215
        %v1217 = vrcp.pop %v1188
        %v1218 = vmul.f32 %v1086, %v1217
        %v1219 = vrcp.pop %v1192
        %v1220 = vmul.f32 %v1088, %v1219
        %v1221 = vrcp.pop %v1196
        %v1222 = vmul.f32 %v1090, %v1221
        %v1223 = vrcp.pop %v1200
        %v1224 = vmul.f32 %v1092, %v1223
        %1233 = vset.pattern.permute.xlu0 0
        %1234 = vperm.xlu0 %1233, %v1210
        %v1235 = vpop.permute.xlu0 %1234
        %1236 = vset.pattern.permute.xlu0 0
        %1237 = vperm.xlu0 %1236, %v1212
        %v1238 = vpop.permute.xlu0 %1237
        %1239 = vset.pattern.permute.xlu0 0
        %1240 = vperm.xlu0 %1239, %v1214
        %v1241 = vpop.permute.xlu0 %1240
        %1242 = vset.pattern.permute.xlu0 0
        %1243 = vperm.xlu0 %1242, %v1216
        %v1244 = vpop.permute.xlu0 %1243
        %1245 = vset.pattern.permute.xlu0 0
        %1246 = vperm.xlu0 %1245, %v1218
        %v1247 = vpop.permute.xlu0 %1246
        %1248 = vset.pattern.permute.xlu0 0
        %1249 = vperm.xlu0 %1248, %v1220
        %v1250 = vpop.permute.xlu0 %1249
        %1251 = vset.pattern.permute.xlu0 0
        %1252 = vperm.xlu0 %1251, %v1222
        %v1253 = vpop.permute.xlu0 %1252
        %1254 = vset.pattern.permute.xlu0 0
        %1255 = vperm.xlu0 %1254, %v1224
        %v1256 = vpop.permute.xlu0 %1255
        %v1257 = vlaneseq
        %v1258 = vshrl.u32 %v1257, 7
        %v1259 = vsub.s32 %v976, %v1258
        %v1260 = vrot.slane %v1235, %v1259
        %v1261 = vlaneseq
        %v1262 = vshrl.u32 %v1261, 7
        %v1263 = vsub.s32 %v976, %v1262
        %v1264 = vrot.slane %v1238, %v1263
        %v1265 = vlaneseq
        %v1266 = vshrl.u32 %v1265, 7
        %v1267 = vsub.s32 %v976, %v1266
        %v1268 = vrot.slane %v1241, %v1267
        %v1269 = vlaneseq
        %v1270 = vshrl.u32 %v1269, 7
        %v1271 = vsub.s32 %v976, %v1270
        %v1272 = vrot.slane %v1244, %v1271
        %v1273 = vlaneseq
        %v1274 = vshrl.u32 %v1273, 7
        %v1275 = vsub.s32 %v976, %v1274
        %v1276 = vrot.slane %v1247, %v1275
        %v1277 = vlaneseq
        %v1278 = vshrl.u32 %v1277, 7
        %v1279 = vsub.s32 %v976, %v1278
        %v1280 = vrot.slane %v1250, %v1279
        %v1281 = vlaneseq
        %v1282 = vshrl.u32 %v1281, 7
        %v1283 = vsub.s32 %v976, %v1282
        %v1284 = vrot.slane %v1253, %v1283
        %v1285 = vlaneseq
        %v1286 = vshrl.u32 %v1285, 7
        %v1287 = vsub.s32 %v976, %v1286
        %v1288 = vrot.slane %v1256, %v1287
        %v1289 = vsel %vm1009, %v1264, %v1260
        %v1290 = vsel %vm1011, %v1268, %v1289
        %v1291 = vsel %vm1013, %v1272, %v1290
        %v1292 = vsel %vm1015, %v1276, %v1291
        %v1293 = vsel %vm1017, %v1280, %v1292
        %v1294 = vsel %vm1019, %v1284, %v1293
        %v1295 = vsel %vm1021, %v1288, %v1294
        %v1297 = vsel %vm1024, %v1295, 0.0
        %1298 = vst [vmem:[%s12] sm:$0xff] %v1297
        %v1307 = vmul.f32 %v1235, %v815
        %v1308 = vmul.f32 %v1238, %v816
        %v1309 = vmul.f32 %v1241, %v817
        %v1310 = vmul.f32 %v1244, %v818
        %v1311 = vmul.f32 %v1247, %v819
        %v1312 = vmul.f32 %v1250, %v820
        %v1313 = vmul.f32 %v1253, %v821
        %v1314 = vmul.f32 %v1256, %v822
        %v1315 = vsel %vm942, %v1307, 0.0
        %v1316 = vrot.slane %v1315, 4
        %v1317 = vadd.f32 %v1315, %v1316
        %v1318 = vrot.slane %v1317, 2
        %v1319 = vadd.f32 %v1317, %v1318
        %v1320 = vrot.slane %v1319, 1
        %v1321 = vadd.f32 %v1319, %v1320
        %v1322 = vsel %vm942, %v1308, 0.0
        %v1323 = vrot.slane %v1322, 4
        %v1324 = vadd.f32 %v1322, %v1323
        %v1325 = vrot.slane %v1324, 2
        %v1326 = vadd.f32 %v1324, %v1325
        %v1327 = vrot.slane %v1326, 1
        %v1328 = vadd.f32 %v1326, %v1327
        %v1329 = vsel %vm942, %v1309, 0.0
        %v1330 = vrot.slane %v1329, 4
        %v1331 = vadd.f32 %v1329, %v1330
        %v1332 = vrot.slane %v1331, 2
        %v1333 = vadd.f32 %v1331, %v1332
        %v1334 = vrot.slane %v1333, 1
        %v1335 = vadd.f32 %v1333, %v1334
        %v1336 = vsel %vm942, %v1310, 0.0
        %v1337 = vrot.slane %v1336, 4
        %v1338 = vadd.f32 %v1336, %v1337
        %v1339 = vrot.slane %v1338, 2
        %v1340 = vadd.f32 %v1338, %v1339
        %v1341 = vrot.slane %v1340, 1
        %v1342 = vadd.f32 %v1340, %v1341
        %v1343 = vsel %vm942, %v1311, 0.0
        %v1344 = vrot.slane %v1343, 4
        %v1345 = vadd.f32 %v1343, %v1344
        %v1346 = vrot.slane %v1345, 2
        %v1347 = vadd.f32 %v1345, %v1346
        %v1348 = vrot.slane %v1347, 1
        %v1349 = vadd.f32 %v1347, %v1348
        %v1350 = vsel %vm942, %v1312, 0.0
        %v1351 = vrot.slane %v1350, 4
        %v1352 = vadd.f32 %v1350, %v1351
        %v1353 = vrot.slane %v1352, 2
        %v1354 = vadd.f32 %v1352, %v1353
        %v1355 = vrot.slane %v1354, 1
        %v1356 = vadd.f32 %v1354, %v1355
        %v1357 = vsel %vm942, %v1313, 0.0
        %v1358 = vrot.slane %v1357, 4
        %v1359 = vadd.f32 %v1357, %v1358
        %v1360 = vrot.slane %v1359, 2
        %v1361 = vadd.f32 %v1359, %v1360
        %v1362 = vrot.slane %v1361, 1
        %v1363 = vadd.f32 %v1361, %v1362
        %v1364 = vsel %vm942, %v1314, 0.0
        %v1365 = vrot.slane %v1364, 4
        %v1366 = vadd.f32 %v1364, %v1365
        %v1367 = vrot.slane %v1366, 2
        %v1368 = vadd.f32 %v1366, %v1367
        %v1369 = vrot.slane %v1368, 1
        %v1370 = vadd.f32 %v1368, %v1369
        %v1379 = vsel %vm1009, %v1328, %v1321
        %v1380 = vsel %vm1011, %v1335, %v1379
        %v1381 = vsel %vm1013, %v1342, %v1380
        %v1382 = vsel %vm1015, %v1349, %v1381
        %v1383 = vsel %vm1017, %v1356, %v1382
        %v1384 = vsel %vm1019, %v1363, %v1383
        %v1385 = vsel %vm1021, %v1370, %v1384
        %1386 = vrot.lane.b32.xlu0 %v1385, 32
        %v1387 = vpop.permute.xlu0 %1386
        %v1389 = vsel %vm942, %v813, %v1387
        %v1390 = vld [vmem:[%s5] sm:$0xff]
        %v1391 = vld [vmem:[%s5 + $0x8] sm:$0xff]
        %v1392 = vld [vmem:[%s5 + $0x10] sm:$0xff]
        %v1393 = vld [vmem:[%s5 + $0x18] sm:$0xff]
        %v1394 = vld [vmem:[%s5 + $0x20] sm:$0xff]
        %v1395 = vld [vmem:[%s5 + $0x28] sm:$0xff]
        %v1396 = vld [vmem:[%s5 + $0x30] sm:$0xff]
        %v1397 = vld [vmem:[%s5 + $0x38] sm:$0xff]
        %v1398 = vld [vmem:[%s4 + $0x1] sm:$0x1]
        %v1399 = vlaneseq
        %v1400 = vshrl.u32 %v1399, 7
        %v1401 = vsub.s32 0, %v1400
        %v1402 = vrot.slane %v1398, %v1401
        %vm1403 = vcmask 523264
        %v1405 = vsel %vm1403, %v1389, 0
        %1407 = vmatprep.subr.mxu0 0.0
        %1408 = vmatpush1.msra.mxu0 0.0
        %1409 = vmatprep.subr.mxu0 0.0
        %1410 = vmatpush1.msra.mxu0 0.0
        %1411 = vmatprep.subr.mxu0 0.0
        %1412 = vmatpush1.msra.mxu0 0.0
        %1413 = vmatprep.subr.mxu0 0.0
        %1414 = vmatpush1.msra.mxu0 0.0
        %1415 = vmatprep.subr.mxu0 0.0
        %1416 = vmatpush1.msra.mxu0 0.0
        %1417 = vmatprep.subr.mxu0 0.0
        %1418 = vmatpush1.msra.mxu0 0.0
        %1419 = vmatprep.subr.mxu0 0.0
        %1420 = vmatpush1.msra.mxu0 0.0
        %1421 = vmatprep.subr.mxu0 0.0
        %1422 = vmatpush1.msra.mxu0 0.0
        %1423 = vmatprep.subr.mxu0 0.0
        %1424 = vmatpush1.msra.mxu0 %v1397
        %1425 = vmatprep.subr.mxu0 0.0
        %1426 = vmatpush1.msra.mxu0 %v1396
        %1427 = vmatprep.subr.mxu0 0.0
        %1428 = vmatpush1.msra.mxu0 %v1395
        %1429 = vmatprep.subr.mxu0 0.0
        %1430 = vmatpush1.msra.mxu0 %v1394
        %1431 = vmatprep.subr.mxu0 0.0
        %1432 = vmatpush1.msra.mxu0 %v1393
        %1433 = vmatprep.subr.mxu0 0.0
        %1434 = vmatpush1.msra.mxu0 %v1392
        %1435 = vmatprep.subr.mxu0 0.0
        %1436 = vmatpush1.msra.mxu0 %v1391
        %1437 = vmatprep.subr.mxu0 0.0
        %1438 = vmatpush1.msra.mxu0 %v1390
        %1439 = vmatprep.subr.mxu0 0.0
        %1440 = vmatpush2.msra.mxu0 0.0
        %1441 = vmatprep.subr.mxu0 0.0
        %1442 = vmatpush2.msra.mxu0 0.0
        %1443 = vmatprep.subr.mxu0 0.0
        %1444 = vmatpush2.msra.mxu0 0.0
        %1445 = vmatprep.subr.mxu0 0.0
        %1446 = vmatpush2.msra.mxu0 0.0
        %1447 = vmatprep.subr.mxu0 0.0
        %1448 = vmatpush2.msra.mxu0 0.0
        %1449 = vmatprep.subr.mxu0 0.0
        %1450 = vmatpush2.msra.mxu0 0.0
        %1451 = vmatprep.subr.mxu0 0.0
        %1452 = vmatpush2.msra.mxu0 0.0
        %1453 = vmatprep.subr.mxu0 0.0
        %1454 = vmatpush2.msra.mxu0 0.0
        %1455 = vmatprep.subr.mxu0 0.0
        %1456 = vmatpush2.msra.mxu0 0.0
        %1457 = vmatprep.subr.mxu0 0.0
        %1458 = vmatpush2.msra.mxu0 0.0
        %1459 = vmatprep.subr.mxu0 0.0
        %1460 = vmatpush2.msra.mxu0 0.0
        %1461 = vmatprep.subr.mxu0 0.0
        %1462 = vmatpush2.msra.mxu0 0.0
        %1463 = vmatprep.subr.mxu0 0.0
        %1464 = vmatpush2.msra.mxu0 0.0
        %1465 = vmatprep.subr.mxu0 0.0
        %1466 = vmatpush2.msra.mxu0 0.0
        %1467 = vmatprep.subr.mxu0 0.0
        %1468 = vmatpush2.msra.mxu0 0.0
        %1469 = vmatprep.subr.mxu0 0.0
        %1470 = vmatpush2.msra.mxu0 0.0
        %1471 = vmatprep.mubr.f32.mxu0 0.0
        %1472 = vmatmul.mubr.f32.gmra.mxu0 %v1405
        %v1473 = vpop.f32.mrf.mxu0
        %v1474 = vadd.f32 %v1402, %v1473
        %v1475 = vpop.f32.mrf.mxu0
        %1476 = vdwg.mxu0
        %v1477 = vmax.f32 %v1474, 0.0
        %v1478 = vld [vmem:[%s6] sm:$0xff]
        %v1479 = vld [vmem:[%s6 + $0x8] sm:$0xff]
        %v1480 = vld [vmem:[%s6 + $0x10] sm:$0xff]
        %v1481 = vld [vmem:[%s6 + $0x18] sm:$0xff]
        %v1482 = vld [vmem:[%s4 + $0x2] sm:$0x1]
        %v1483 = vlaneseq
        %v1484 = vshrl.u32 %v1483, 7
        %v1485 = vsub.s32 0, %v1484
        %v1486 = vrot.slane %v1482, %v1485
        %v1488 = vsel %vm942, %v1477, 0
        %1490 = vmatprep.subr.mxu0 0.0
        %1491 = vmatpush1.msra.mxu0 0.0
        %1492 = vmatprep.subr.mxu0 0.0
        %1493 = vmatpush1.msra.mxu0 0.0
        %1494 = vmatprep.subr.mxu0 0.0
        %1495 = vmatpush1.msra.mxu0 0.0
        %1496 = vmatprep.subr.mxu0 0.0
        %1497 = vmatpush1.msra.mxu0 0.0
        %1498 = vmatprep.subr.mxu0 0.0
        %1499 = vmatpush1.msra.mxu0 0.0
        %1500 = vmatprep.subr.mxu0 0.0
        %1501 = vmatpush1.msra.mxu0 0.0
        %1502 = vmatprep.subr.mxu0 0.0
        %1503 = vmatpush1.msra.mxu0 0.0
        %1504 = vmatprep.subr.mxu0 0.0
        %1505 = vmatpush1.msra.mxu0 0.0
        %1506 = vmatprep.subr.mxu0 0.0
        %1507 = vmatpush1.msra.mxu0 0.0
        %1508 = vmatprep.subr.mxu0 0.0
        %1509 = vmatpush1.msra.mxu0 0.0
        %1510 = vmatprep.subr.mxu0 0.0
        %1511 = vmatpush1.msra.mxu0 0.0
        %1512 = vmatprep.subr.mxu0 0.0
        %1513 = vmatpush1.msra.mxu0 0.0
        %1514 = vmatprep.subr.mxu0 0.0
        %1515 = vmatpush1.msra.mxu0 %v1481
        %1516 = vmatprep.subr.mxu0 0.0
        %1517 = vmatpush1.msra.mxu0 %v1480
        %1518 = vmatprep.subr.mxu0 0.0
        %1519 = vmatpush1.msra.mxu0 %v1479
        %1520 = vmatprep.subr.mxu0 0.0
        %1521 = vmatpush1.msra.mxu0 %v1478
        %1522 = vmatprep.subr.mxu0 0.0
        %1523 = vmatpush2.msra.mxu0 0.0
        %1524 = vmatprep.subr.mxu0 0.0
        %1525 = vmatpush2.msra.mxu0 0.0
        %1526 = vmatprep.subr.mxu0 0.0
        %1527 = vmatpush2.msra.mxu0 0.0
        %1528 = vmatprep.subr.mxu0 0.0
        %1529 = vmatpush2.msra.mxu0 0.0
        %1530 = vmatprep.subr.mxu0 0.0
        %1531 = vmatpush2.msra.mxu0 0.0
        %1532 = vmatprep.subr.mxu0 0.0
        %1533 = vmatpush2.msra.mxu0 0.0
        %1534 = vmatprep.subr.mxu0 0.0
        %1535 = vmatpush2.msra.mxu0 0.0
        %1536 = vmatprep.subr.mxu0 0.0
        %1537 = vmatpush2.msra.mxu0 0.0
        %1538 = vmatprep.subr.mxu0 0.0
        %1539 = vmatpush2.msra.mxu0 0.0
        %1540 = vmatprep.subr.mxu0 0.0
        %1541 = vmatpush2.msra.mxu0 0.0
        %1542 = vmatprep.subr.mxu0 0.0
        %1543 = vmatpush2.msra.mxu0 0.0
        %1544 = vmatprep.subr.mxu0 0.0
        %1545 = vmatpush2.msra.mxu0 0.0
        %1546 = vmatprep.subr.mxu0 0.0
        %1547 = vmatpush2.msra.mxu0 0.0
        %1548 = vmatprep.subr.mxu0 0.0
        %1549 = vmatpush2.msra.mxu0 0.0
        %1550 = vmatprep.subr.mxu0 0.0
        %1551 = vmatpush2.msra.mxu0 0.0
        %1552 = vmatprep.subr.mxu0 0.0
        %1553 = vmatpush2.msra.mxu0 0.0
        %1554 = vmatprep.mubr.f32.mxu0 0.0
        %1555 = vmatmul.mubr.f32.gmra.mxu0 %v1488
        %v1556 = vpop.f32.mrf.mxu0
        %v1557 = vadd.f32 %v1486, %v1556
        %v1558 = vpop.f32.mrf.mxu0
        %1559 = vdwg.mxu0
        %v1560 = vld [vmem:[%s7] sm:$0xff]
        %v1561 = vld [vmem:[%s7 + $0x8] sm:$0xff]
        %v1562 = vld [vmem:[%s7 + $0x10] sm:$0xff]
        %v1563 = vld [vmem:[%s7 + $0x18] sm:$0xff]
        %v1564 = vld [vmem:[%s4 + $0x3] sm:$0x1]
        %v1565 = vlaneseq
        %v1566 = vshrl.u32 %v1565, 7
        %v1567 = vsub.s32 0, %v1566
        %v1568 = vrot.slane %v1564, %v1567
        %v1569 = vsel %vm942, %v814, 0
        %1571 = vmatprep.subr.mxu0 0.0
        %1572 = vmatpush1.msra.mxu0 0.0
        %1573 = vmatprep.subr.mxu0 0.0
        %1574 = vmatpush1.msra.mxu0 0.0
        %1575 = vmatprep.subr.mxu0 0.0
        %1576 = vmatpush1.msra.mxu0 0.0
        %1577 = vmatprep.subr.mxu0 0.0
        %1578 = vmatpush1.msra.mxu0 0.0
        %1579 = vmatprep.subr.mxu0 0.0
        %1580 = vmatpush1.msra.mxu0 0.0
        %1581 = vmatprep.subr.mxu0 0.0
        %1582 = vmatpush1.msra.mxu0 0.0
        %1583 = vmatprep.subr.mxu0 0.0
        %1584 = vmatpush1.msra.mxu0 0.0
        %1585 = vmatprep.subr.mxu0 0.0
        %1586 = vmatpush1.msra.mxu0 0.0
        %1587 = vmatprep.subr.mxu0 0.0
        %1588 = vmatpush1.msra.mxu0 0.0
        %1589 = vmatprep.subr.mxu0 0.0
        %1590 = vmatpush1.msra.mxu0 0.0
        %1591 = vmatprep.subr.mxu0 0.0
        %1592 = vmatpush1.msra.mxu0 0.0
        %1593 = vmatprep.subr.mxu0 0.0
        %1594 = vmatpush1.msra.mxu0 0.0
        %1595 = vmatprep.subr.mxu0 0.0
        %1596 = vmatpush1.msra.mxu0 %v1563
        %1597 = vmatprep.subr.mxu0 0.0
        %1598 = vmatpush1.msra.mxu0 %v1562
        %1599 = vmatprep.subr.mxu0 0.0
        %1600 = vmatpush1.msra.mxu0 %v1561
        %1601 = vmatprep.subr.mxu0 0.0
        %1602 = vmatpush1.msra.mxu0 %v1560
        %1603 = vmatprep.subr.mxu0 0.0
        %1604 = vmatpush2.msra.mxu0 0.0
        %1605 = vmatprep.subr.mxu0 0.0
        %1606 = vmatpush2.msra.mxu0 0.0
        %1607 = vmatprep.subr.mxu0 0.0
        %1608 = vmatpush2.msra.mxu0 0.0
        %1609 = vmatprep.subr.mxu0 0.0
        %1610 = vmatpush2.msra.mxu0 0.0
        %1611 = vmatprep.subr.mxu0 0.0
        %1612 = vmatpush2.msra.mxu0 0.0
        %1613 = vmatprep.subr.mxu0 0.0
        %1614 = vmatpush2.msra.mxu0 0.0
        %1615 = vmatprep.subr.mxu0 0.0
        %1616 = vmatpush2.msra.mxu0 0.0
        %1617 = vmatprep.subr.mxu0 0.0
        %1618 = vmatpush2.msra.mxu0 0.0
        %1619 = vmatprep.subr.mxu0 0.0
        %1620 = vmatpush2.msra.mxu0 0.0
        %1621 = vmatprep.subr.mxu0 0.0
        %1622 = vmatpush2.msra.mxu0 0.0
        %1623 = vmatprep.subr.mxu0 0.0
        %1624 = vmatpush2.msra.mxu0 0.0
        %1625 = vmatprep.subr.mxu0 0.0
        %1626 = vmatpush2.msra.mxu0 0.0
        %1627 = vmatprep.subr.mxu0 0.0
        %1628 = vmatpush2.msra.mxu0 0.0
        %1629 = vmatprep.subr.mxu0 0.0
        %1630 = vmatpush2.msra.mxu0 0.0
        %1631 = vmatprep.subr.mxu0 0.0
        %1632 = vmatpush2.msra.mxu0 0.0
        %1633 = vmatprep.subr.mxu0 0.0
        %1634 = vmatpush2.msra.mxu0 0.0
        %1635 = vmatprep.mubr.f32.mxu0 0.0
        %1636 = vmatmul.mubr.f32.gmra.mxu0 %v1569
        %v1637 = vpop.f32.mrf.mxu0
        %v1638 = vadd.f32 %v1568, %v1637
        %v1639 = vpop.f32.mrf.mxu0
        %1640 = vdwg.mxu0
        %v1641 = vadd.f32 %v1557, %v1638
        %v1642 = vxor.u32 %v1641, 2147483648
        %v1643 = vmul.f32 %v1642, 1.442695
        %v1644 = vpow.pop %v1643
        %v1645 = vadd.f32 %v1644, 1.0
        %v1646 = vrcp.pop %v1645
        %v1647 = vmul.f32 1.0, %v1646
        %1649 = vrot.lane.b32.xlu0 %v1638, 64
        %v1650 = vpop.permute.xlu0 %1649
        %v1652 = vmul.f32 %v1647, %v1650
        %1654 = vrot.lane.b32.xlu0 %v1652, 64
        %v1655 = vpop.permute.xlu0 %1654
        %v1657 = vadd.f32 %v1557, %v1655
        %v1658 = vtanh.pop %v1657
        %v1659 = vsub.f32 1.0, %v1647
        %1661 = vrot.lane.b32.xlu0 %v1658, 96
        %v1662 = vpop.permute.xlu0 %1661
        %v1664 = vmul.f32 %v1659, %v1662
        %1665 = vrot.lane.b32.xlu0 %v814, 32
        %v1666 = vpop.permute.xlu0 %1665
        %v1668 = vmul.f32 %v1647, %v1666
        %v1669 = vadd.f32 %v1664, %v1668
        %1671 = vrot.lane.b32.xlu0 %v1669, 96
        %v1672 = vpop.permute.xlu0 %1671
        %1674 = vst.msk [vmem:[#allocation3] sm:$0xff] %vm942, %v1672
        %v1675 = vsel %vm942, %v1672, 0.0
        %1676 = vst [vmem:[%s11] sm:$0xff] %v1675
        %vm1677 = vcmask 7168
        %1678 = vst.msk [vmem:[#allocation4] sm:$0xff] %vm1677, -inf
        %1679 = vst.msk [vmem:[#allocation5] sm:$0xff] %vm1677, 0.0
      $region56: #{attention_decoder_v2.1} parent=51 // pred_fallthru
        _
      %v1680 = vld [vmem:[#allocation3] sm:$0xff]
      %v1681 = vld [vmem:[%s376] sm:$0xff]
      %v1682 = vld [vmem:[%s376 + $0x8] sm:$0xff]
      %v1683 = vld [vmem:[%s376 + $0x10] sm:$0xff]
      %v1684 = vld [vmem:[%s376 + $0x18] sm:$0xff]
      %v1685 = vld [vmem:[%s379] sm:$0x1]
      %v1687 = vlaneseq
      %v1688 = vshrl.u32 %v1687, 7
      %v1689 = vsub.s32 0, %v1688
      %v1690 = vrot.slane %v1685, %v1689
      %vm1692 = vcmask 261120
      %v1694 = vsel %vm1692, %v1680, 0
      %1696 = vmatprep.subr.mxu0 0.0
      %1697 = vmatpush1.msra.mxu0 0.0
      %1698 = vmatprep.subr.mxu0 0.0
      %1699 = vmatpush1.msra.mxu0 0.0
      %1700 = vmatprep.subr.mxu0 0.0
      %1701 = vmatpush1.msra.mxu0 0.0
      %1702 = vmatprep.subr.mxu0 0.0
      %1703 = vmatpush1.msra.mxu0 0.0
      %1704 = vmatprep.subr.mxu0 0.0
      %1705 = vmatpush1.msra.mxu0 0.0
      %1706 = vmatprep.subr.mxu0 0.0
      %1707 = vmatpush1.msra.mxu0 0.0
      %1708 = vmatprep.subr.mxu0 0.0
      %1709 = vmatpush1.msra.mxu0 0.0
      %1710 = vmatprep.subr.mxu0 0.0
      %1711 = vmatpush1.msra.mxu0 0.0
      %1712 = vmatprep.subr.mxu0 0.0
      %1713 = vmatpush1.msra.mxu0 0.0
      %1714 = vmatprep.subr.mxu0 0.0
      %1715 = vmatpush1.msra.mxu0 0.0
      %1716 = vmatprep.subr.mxu0 0.0
      %1717 = vmatpush1.msra.mxu0 0.0
      %1718 = vmatprep.subr.mxu0 0.0
      %1719 = vmatpush1.msra.mxu0 0.0
      %1720 = vmatprep.subr.mxu0 0.0
      %1721 = vmatpush1.msra.mxu0 %v1684
      %1722 = vmatprep.subr.mxu0 0.0
      %1723 = vmatpush1.msra.mxu0 %v1683
      %1724 = vmatprep.subr.mxu0 0.0
      %1725 = vmatpush1.msra.mxu0 %v1682
      %1726 = vmatprep.subr.mxu0 0.0
      %1727 = vmatpush1.msra.mxu0 %v1681
      %1728 = vmatprep.subr.mxu0 0.0
      %1729 = vmatpush2.msra.mxu0 0.0
      %1730 = vmatprep.subr.mxu0 0.0
      %1731 = vmatpush2.msra.mxu0 0.0
      %1732 = vmatprep.subr.mxu0 0.0
      %1733 = vmatpush2.msra.mxu0 0.0
      %1734 = vmatprep.subr.mxu0 0.0
      %1735 = vmatpush2.msra.mxu0 0.0
      %1736 = vmatprep.subr.mxu0 0.0
      %1737 = vmatpush2.msra.mxu0 0.0
      %1738 = vmatprep.subr.mxu0 0.0
      %1739 = vmatpush2.msra.mxu0 0.0
      %1740 = vmatprep.subr.mxu0 0.0
      %1741 = vmatpush2.msra.mxu0 0.0
      %1742 = vmatprep.subr.mxu0 0.0
      %1743 = vmatpush2.msra.mxu0 0.0
      %1744 = vmatprep.subr.mxu0 0.0
      %1745 = vmatpush2.msra.mxu0 0.0
      %1746 = vmatprep.subr.mxu0 0.0
      %1747 = vmatpush2.msra.mxu0 0.0
      %1748 = vmatprep.subr.mxu0 0.0
      %1749 = vmatpush2.msra.mxu0 0.0
      %1750 = vmatprep.subr.mxu0 0.0
      %1751 = vmatpush2.msra.mxu0 0.0
      %1752 = vmatprep.subr.mxu0 0.0
      %1753 = vmatpush2.msra.mxu0 0.0
      %1754 = vmatprep.subr.mxu0 0.0
      %1755 = vmatpush2.msra.mxu0 0.0
      %1756 = vmatprep.subr.mxu0 0.0
      %1757 = vmatpush2.msra.mxu0 0.0
      %1758 = vmatprep.subr.mxu0 0.0
      %1759 = vmatpush2.msra.mxu0 0.0
      %1760 = vmatprep.mubr.f32.mxu0 0.0
      %1761 = vmatmul.mubr.f32.gmra.mxu0 %v1694
      %v1762 = vpop.f32.mrf.mxu0
      %v1763 = vadd.f32 %v1690, %v1762
      %v1764 = vpop.f32.mrf.mxu0
      %1765 = vdwg.mxu0
      // Predicated region
      $region297: #{attention_decoder_v2.1} parent=51 // pred_check
        %p1766 = pneg %p384
      $region298: #{attention_decoder_v2.1} parent=51 // pred_check_branch
        %1768 = sbr.rel (%p1766) target = $region300
      $region299: #{attention_decoder_v2.1} parent=51 // pred_region
        %v1769 = vld [vmem:[#allocation4] sm:$0xff]
        %1770 = vmax.xlane.f32.xlu0 %v1763
        %v1771 = vpop.xlane.xlu0 %1770
        %v1772 = vmax.f32 %v1769, %v1771
        %v1773 = vld [vmem:[#allocation5] sm:$0xff]
        %v1774 = vsub.f32 %v1769, %v1772
        %v1775 = vmul.f32 %v1774, 1.442695
        %v1776 = vpow.pop %v1775
        %v1777 = vmul.f32 %v1773, %v1776
        %1779 = vset.pattern.permute.xlu0 0
        %1780 = vperm.xlu0 %1779, %v1772
        %v1781 = vpop.permute.xlu0 %1780
        %v1783 = vsub.f32 %v1763, %v1781
        %v1784 = vmul.f32 %v1783, 1.442695
        %v1785 = vpow.pop %v1784
        %1786 = vadd.xlane.f32.xlu0 %v1785
        %v1787 = vpop.xlane.xlu0 %1786
        %v1788 = vadd.f32 %v1777, %v1787
        %vm1789 = vcmask 7168
        %1790 = vst.msk [vmem:[#allocation5] sm:$0xff] %vm1789, %v1788
        %1791 = vst.msk [vmem:[#allocation4] sm:$0xff] %vm1789, %v1772
      $region300: #{attention_decoder_v2.1} parent=51 // pred_fallthru
        _
      %p1792 = scmp.eq.s32.totalorder %s34, 1
      // Predicated region
      $region301: #{attention_decoder_v2.1} parent=51 // pred_check
        %p1793 = pneg %p1792
      $region302: #{attention_decoder_v2.1} parent=51 // pred_check_branch
        %1795 = sbr.rel (%p1793) target = $region304
      $region303: #{attention_decoder_v2.1} parent=51 // pred_region
        %v1796 = vld [vmem:[#allocation4] sm:$0xff]
        %v1797 = vld [vmem:[#allocation5] sm:$0xff]
        %v1798 = vlog2.pop %v1797
        %v1799 = vmul.f32 %v1798, 0.6931472
        %v1800 = vadd.f32 %v1796, %v1799
        %1802 = vset.pattern.permute.xlu0 0
        %1803 = vperm.xlu0 %1802, %v1800
        %v1804 = vpop.permute.xlu0 %1803
        %v1806 = vsub.f32 %v1763, %v1804
        %1807 = vst [vmem:[%s383] sm:$0xff] %v1806
      $region304: #{attention_decoder_v2.1} parent=51 // pred_fallthru
        _
      %p1808 = scmp.lt.s32.totalorder %s35, 0
      %s1809 = scalar_select %p1808, %s35, 0
      %s1810 = smul.addr %s1809, 8
      %s1811 = scalar_lea.vmem %s10, %s1810
      // Predicated region
      $region305: #{attention_decoder_v2.1} parent=51 // pred_check
        %p1812 = pneg %p238
      $region306: #{attention_decoder_v2.1} parent=51 // pred_check_branch
        %1814 = sbr.rel (%p1812) target = $region308
      $region307: #{attention_decoder_v2.1} parent=51 // pred_region
        _
      $region308: #{attention_decoder_v2.1} parent=51 // pred_fallthru
        _
      // Predicated region
      $region309: #{attention_decoder_v2.1} parent=51 // pred_check
        %p1815 = pneg %p259
      $region310: #{attention_decoder_v2.1} parent=51 // pred_check_branch
        %1817 = sbr.rel (%p1815) target = $region312
      $region311: #{attention_decoder_v2.1} parent=51 // pred_region
        _
      $region312: #{attention_decoder_v2.1} parent=51 // pred_fallthru
        _
      // Predicated region
      $region313: #{attention_decoder_v2.1} parent=51 // pred_check
        %p1818 = pneg %p280
      $region314: #{attention_decoder_v2.1} parent=51 // pred_check_branch
        %1820 = sbr.rel (%p1818) target = $region316
      $region315: #{attention_decoder_v2.1} parent=51 // pred_region
        _
      $region316: #{attention_decoder_v2.1} parent=51 // pred_fallthru
        _
      // Predicated region
      $region317: #{attention_decoder_v2.1} parent=51 // pred_check
        %p1821 = pneg %p238
      $region318: #{attention_decoder_v2.1} parent=51 // pred_check_branch
        %1823 = sbr.rel (%p1821) target = $region320
      $region319: #{attention_decoder_v2.1} parent=51 // pred_region
        %p1824 = scmp.lt.s32.totalorder %s35, 0
        %s1825 = scalar_select %p1824, %s35, 0
        %s1826 = smul.addr %s1825, 8
        %s1827 = scalar_lea.vmem %s10, %s1826
      $region320: #{attention_decoder_v2.1} parent=51 // pred_fallthru
        _
      // Predicated region
      $region321: #{attention_decoder_v2.1} parent=51 // pred_check
        %p1828 = pneg %p259
      $region322: #{attention_decoder_v2.1} parent=51 // pred_check_branch
        %1830 = sbr.rel (%p1828) target = $region324
      $region323: #{attention_decoder_v2.1} parent=51 // pred_region
        _
      $region324: #{attention_decoder_v2.1} parent=51 // pred_fallthru
        _
      // Predicated region
      $region325: #{attention_decoder_v2.1} parent=51 // pred_check
        %p1831 = pneg %p280
      $region326: #{attention_decoder_v2.1} parent=51 // pred_check_branch
        %1833 = sbr.rel (%p1831) target = $region328
      $region327: #{attention_decoder_v2.1} parent=51 // pred_region
        _
      $region328: #{attention_decoder_v2.1} parent=51 // pred_fallthru
        _
    $region52: #{attention_decoder_v2.1} parent=5 // pred_fallthru
      _
    %p1834 = scmp.le.s32.totalorder 2, %s25
    // Predicated region
    $region329: #{attention_decoder_v2.1} parent=5 // pred_check
      %p1835 = pneg %p1834
    $region330: #{attention_decoder_v2.1} parent=5 // pred_check_branch
      %1837 = sbr.rel (%p1835) target = $region332
    $region331: #{attention_decoder_v2.1} parent=5 // pred_region
      %s1838 = ssub.s32 %s25, 2
    $region332: #{attention_decoder_v2.1} parent=5 // pred_fallthru
      _
  $region6: #{attention_decoder_v2.1} parent=0 // loop_footer
    %s29 = sadd.s32 1, %s25
  $region7: #{attention_decoder_v2.1} parent=0 // loop_footer_branch
    %24 = sbr.rel target = $region3
  $region8: #{attention_decoder_v2.1} parent=0 // loop_exit
    _
  %1839 = vsyncmov [#allocation6]
  %s1840 = vpop.sfrf %1839
  %p1841 = scmp.eq.s32.totalorder %s1840, 0
  %p1842 = pneg %p1841
  %1844 = shalt.err (%p1842)
  %s1845 = scalar_lea.sflag [#allocation6], 1
  %1846 = vsyncmov %s1845
  %s1847 = vpop.sfrf %1846
  %p1848 = scmp.eq.s32.totalorder %s1847, 0
  %p1849 = pneg %p1848
  %1851 = shalt.err (%p1849)
  %s1852 = scalar_lea.sflag [#allocation6], 2
  %1853 = vsyncmov %s1852
  %s1854 = vpop.sfrf %1853
  %p1855 = scmp.eq.s32.totalorder %s1854, 0
  %p1856 = pneg %p1855
  %1858 = shalt.err (%p1856)
  %s1859 = scalar_lea.sflag [#allocation6], 3
  %1860 = vsyncmov %s1859
  %s1861 = vpop.sfrf %1860
  %p1862 = scmp.eq.s32.totalorder %s1861, 0
  %p1863 = pneg %p1862
  %1865 = shalt.err (%p1863)
  %s1866 = scalar_lea.sflag [#allocation6], 4
  %1867 = vsyncmov %s1866
  %s1868 = vpop.sfrf %1867
  %p1869 = scmp.eq.s32.totalorder %s1868, 0
  %p1870 = pneg %p1869
  %1872 = shalt.err (%p1870)
  %s1873 = scalar_lea.sflag [#allocation6], 5
  %1874 = vsyncmov %s1873
  %s1875 = vpop.sfrf %1874
  %p1876 = scmp.eq.s32.totalorder %s1875, 0
  %p1877 = pneg %p1876
  %1879 = shalt.err (%p1877)
  %s1880 = scalar_lea.sflag [#allocation6], 6
  %1881 = vsyncmov %s1880
  %s1882 = vpop.sfrf %1881
  %p1883 = scmp.eq.s32.totalorder %s1882, 0
  %p1884 = pneg %p1883
  %1886 = shalt.err (%p1884)
  %s1887 = scalar_lea.sflag [#allocation6], 7
  %1888 = vsyncmov %s1887
  %s1889 = vpop.sfrf %1888
  %p1890 = scmp.eq.s32.totalorder %s1889, 0
  %p1891 = pneg %p1890
  %1893 = shalt.err (%p1891)

</llo_original>
